<compile_context>
chip_gen: v7x
topology: tpu7x:2x2x1
jax: 0.10.0
libtpu: 0.0.40
codegen_flags: <defaults>
</compile_context>

<pallas_src>
import jax
import jax.numpy as jnp
from jax.experimental import pallas as pl
from jax.experimental.pallas import tpu as pltpu

# MXU operand dtype (weights / x / h).  Accumulation & state stay f32.
MATMUL_DTYPE = jnp.bfloat16


# ---------------------------------------------------------------------------
# Fused kernel: all layers + time loop + FC head in one invocation.
# ---------------------------------------------------------------------------
def _make_fused_kernel(T, B, H, L):
    G = 4 * H

    def kernel(*args):
        # args = [x, (wih, whh, b) * L, fc_w, fc_b, out, seq_scratch]
        x_ref = args[0]
        layer_refs = [(args[1 + 3 * l], args[2 + 3 * l], args[3 + 3 * l])
                      for l in range(L)]
        fcw_ref = args[1 + 3 * L]          # (1, H)  f32
        fcb_ref = args[2 + 3 * L]          # (1, 1)  f32
        out_ref = args[3 + 3 * L]          # (B, 1)  f32
        seq_ref = args[4 + 3 * L]          # (T*B, H) f32 VMEM scratch

        # Lane mask for gate activations, hoisted (built once, reused by all
        # unrolled steps; JAX does not CSE broadcast_in_dim).
        lane = jax.lax.broadcasted_iota(jnp.int32, (B, G), 1)
        is_g = (lane >= 2 * H) & (lane < 3 * H)

        h_last = None
        for l, (wih_ref, whh_ref, b_ref) in enumerate(layer_refs):
            wih = wih_ref[...]                       # (Din, 4H) bf16
            whh = whh_ref[...]                       # (H,   4H) bf16

            if l == 0:
                layer_in = x_ref[...]                # (T*B, Din)
            else:
                layer_in = seq_ref[...]              # (T*B, H)

            # Hoisted input projection (+ bias) for the whole sequence:
            # one MXU pass with T*B rows of fill instead of B per step.
            xg_all = jnp.dot(layer_in.astype(wih.dtype), wih,
                             preferred_element_type=jnp.float32) + b_ref[...]

            h = jnp.zeros((B, H), jnp.float32)
            c = jnp.zeros((B, H), jnp.float32)
            for t in range(T):                       # T is static -> unroll
                gates = xg_all[t * B:(t + 1) * B, :] + jnp.dot(
                    h.astype(whh.dtype), whh,
                    preferred_element_type=jnp.float32)          # (B, 4H)

                # Full-vreg activation pass (EUP): tanh on the g block,
                # sigmoid elsewhere; then static lane slices for the narrow
                # (B, H) elementwise combine.
                act = jnp.where(is_g, jnp.tanh(gates), jax.nn.sigmoid(gates))
                i_g = act[:, 0 * H:1 * H]
                f_g = act[:, 1 * H:2 * H]
                g_g = act[:, 2 * H:3 * H]
                o_g = act[:, 3 * H:4 * H]

                c = f_g * c + i_g * g_g
                h = o_g * jnp.tanh(c)

                if l < L - 1:                        # feed next layer, VMEM-only
                    seq_ref[t * B:(t + 1) * B, :] = h
            h_last = h

        # Fused FC head: VPU multiply + lane reduction (+ bias); only this
        # (B, 1) result leaves VMEM.
        out_ref[...] = (
            jnp.sum(h_last * fcw_ref[...], axis=-1, keepdims=True) + fcb_ref[...]
        ).astype(out_ref.dtype)

    return kernel


# ---------------------------------------------------------------------------
# Forward: matches BitcoinLSTM.forward (eval mode)
# ---------------------------------------------------------------------------
@jax.jit
def bitcoin_lstm_forward(params, x_btd):
    B, T, D = x_btd.shape
    layers = params["layers"]
    L = len(layers)
    H = layers[0]["whh_t"].shape[0]
    G = 4 * H

    # Time-major, flattened (T*B, D) so the layer-0 input projection is one matmul.
    x_flat = jnp.transpose(x_btd, (1, 0, 2)).reshape(T * B, D).astype(jnp.float32)

    inputs = [x_flat]
    in_specs = [pl.BlockSpec((T * B, D), lambda: (0, 0))]
    for lp in layers:
        d_in = lp["wih_t"].shape[0]
        inputs += [lp["wih_t"].astype(MATMUL_DTYPE),
                   lp["whh_t"].astype(MATMUL_DTYPE),
                   lp["b"]]
        in_specs += [pl.BlockSpec((d_in, G), lambda: (0, 0)),
                     pl.BlockSpec((H, G), lambda: (0, 0)),
                     pl.BlockSpec((1, G), lambda: (0, 0))]
    inputs += [params["fc_w_row"], params["fc_b"]]
    in_specs += [pl.BlockSpec((1, H), lambda: (0, 0)),
                 pl.BlockSpec((1, 1), lambda: (0, 0))]

    return pl.pallas_call(
        _make_fused_kernel(T, B, H, L),
        out_shape=jax.ShapeDtypeStruct((B, 1), jnp.float32),
        in_specs=in_specs,
        out_specs=pl.BlockSpec((B, 1), lambda: (0, 0)),
        scratch_shapes=[pltpu.VMEM((T * B, H), jnp.float32)],  # inter-layer seq
    )(*inputs)


# ---------------------------------------------------------------------------
# Parameter init (deterministic, PyTorch-style U(-1/sqrt(H), 1/sqrt(H)));
# f32 masters, cast to bf16 for MXU operands at call time.
# ---------------------------------------------------------------------------
def init_params(key, input_size, hidden_size, num_layers):
    k = 1.0 / jnp.sqrt(jnp.float32(hidden_size))
    params = {"layers": []}
    for layer in range(num_layers):
        d_in = input_size if layer == 0 else hidden_size
        keys = jax.random.split(jax.random.fold_in(key, layer), 4)
        wih = jax.random.uniform(keys[0], (4 * hidden_size, d_in), jnp.float32, -k, k)
        whh = jax.random.uniform(keys[1], (4 * hidden_size, hidden_size), jnp.float32, -k, k)
        bih = jax.random.uniform(keys[2], (4 * hidden_size,), jnp.float32, -k, k)
        bhh = jax.random.uniform(keys[3], (4 * hidden_size,), jnp.float32, -k, k)
        params["layers"].append({
            "wih_t": wih.T,                       # (Din, 4H)
            "whh_t": whh.T,                       # (H,   4H)
            "b": (bih + bhh).reshape(1, -1),      # (1,   4H)
        })
    kf = jax.random.split(jax.random.fold_in(key, 1000), 2)
    params["fc_w_row"] = jax.random.uniform(kf[0], (1, hidden_size), jnp.float32, -k, k)
    params["fc_b"] = jax.random.uniform(kf[1], (1, 1), jnp.float32, -k, k)
    return params


# ---------------------------------------------------------------------------
# Pure-JAX f32 reference (same math as PyTorch eval-mode forward)
# ---------------------------------------------------------------------------
def _reference_forward(params, x_btd):
    x = jnp.transpose(x_btd, (1, 0, 2)).astype(jnp.float32)   # (T, B, D)
    T, B, _ = x.shape
    seq = x
    for lp in params["layers"]:
        wih_t, whh_t, b = lp["wih_t"], lp["whh_t"], lp["b"]
        H = whh_t.shape[0]
        h = jnp.zeros((B, H), jnp.float32)
        c = jnp.zeros((B, H), jnp.float32)
        outs = []
        for t in range(T):
            gates = seq[t] @ wih_t + h @ whh_t + b
            i_g = jax.nn.sigmoid(gates[:, 0 * H:1 * H])
            f_g = jax.nn.sigmoid(gates[:, 1 * H:2 * H])
            g_g = jnp.tanh(gates[:, 2 * H:3 * H])
            o_g = jax.nn.sigmoid(gates[:, 3 * H:4 * H])
            c = f_g * c + i_g * g_g
            h = o_g * jnp.tanh(c)
            outs.append(h)
        seq = jnp.stack(outs, axis=0)
    return seq[-1] @ params["fc_w_row"].T + params["fc_b"]


if __name__ == "__main__":
    INPUT_SIZE = 4
    HIDDEN_SIZE = 32
    NUM_LAYERS = 2
    DROPOUT = 0.2  # identity at inference
    B, T = 2, 8

    key = jax.random.PRNGKey(0)
    pkey, xkey = jax.random.split(key)
    params = init_params(pkey, INPUT_SIZE, HIDDEN_SIZE, NUM_LAYERS)
    x = jax.random.normal(xkey, (B, T, INPUT_SIZE), dtype=jnp.float32)

    out = bitcoin_lstm_forward(params, x)
    jax.block_until_ready(out)
    assert out.shape == (B, 1), out.shape

    ref = _reference_forward(params, x)
    max_err = float(jnp.max(jnp.abs(out - ref)))
    # bf16 MXU operands with f32 accumulation/state -> small, bounded deviation.
    assert max_err < 1e-1, f"mismatch vs f32 reference: {max_err}"

    print("KERNEL_OK")
</pallas_src>

<mosaic_0001>
module attributes {stable_mosaic.version = 11 : i64} {
  func.func @kernel(%arg0: memref<16x4xf32, #tpu.memory_space<vmem>>, %arg1: memref<4x128xbf16, #tpu.memory_space<vmem>>, %arg2: memref<32x128xbf16, #tpu.memory_space<vmem>>, %arg3: memref<1x128xf32, #tpu.memory_space<vmem>>, %arg4: memref<32x128xbf16, #tpu.memory_space<vmem>>, %arg5: memref<32x128xbf16, #tpu.memory_space<vmem>>, %arg6: memref<1x128xf32, #tpu.memory_space<vmem>>, %arg7: memref<1x32xf32, #tpu.memory_space<vmem>>, %arg8: memref<1x1xf32, #tpu.memory_space<vmem>>, %arg9: memref<2x1xf32, #tpu.memory_space<vmem>>, %arg10: memref<16x32xf32, #tpu.memory_space<vmem>>) attributes {dimension_semantics = [], scalar_prefetch = 0 : i64, scratch_operands = 1 : i64, tpu.core_type = #tpu.core_type<tc>} {
    %0 = tpu.iota {dimensions = array<i32: 1>} : vector<2x128xi32>
    %c64_i32 = arith.constant 64 : i32
    %1 = vector.broadcast %c64_i32 : i32 to vector<2x128xi32>
    %2 = arith.cmpi sge, %0, %1 : vector<2x128xi32>
    %c96_i32 = arith.constant 96 : i32
    %3 = vector.broadcast %c96_i32 : i32 to vector<2x128xi32>
    %4 = arith.cmpi slt, %0, %3 : vector<2x128xi32>
    %5 = arith.andi %2, %4 : vector<2x128xi1>
    %c0 = arith.constant 0 : index
    %c0_0 = arith.constant 0 : index
    %6 = vector.load %arg1[%c0, %c0_0] : memref<4x128xbf16, #tpu.memory_space<vmem>>, vector<4x128xbf16>
    %c0_1 = arith.constant 0 : index
    %c0_2 = arith.constant 0 : index
    %7 = vector.load %arg2[%c0_1, %c0_2] : memref<32x128xbf16, #tpu.memory_space<vmem>>, vector<32x128xbf16>
    %c0_3 = arith.constant 0 : index
    %c0_4 = arith.constant 0 : index
    %8 = vector.load %arg0[%c0_3, %c0_4] : memref<16x4xf32, #tpu.memory_space<vmem>>, vector<16x4xf32>
    %9 = arith.truncf %8 : vector<16x4xf32> to vector<16x4xbf16>
    %cst = arith.constant dense<0.000000e+00> : vector<16x128xf32>
    %10 = tpu.matmul %9, %6, %cst {dimension_numbers = #tpu.dot_dimension_numbers<[1], [0], [0], [1], [0, 0, 1, 1], [], []>} : vector<16x4xbf16>, vector<4x128xbf16>, vector<16x128xf32> -> vector<16x128xf32>
    %c0_5 = arith.constant 0 : index
    %c0_6 = arith.constant 0 : index
    %11 = vector.load %arg3[%c0_5, %c0_6] : memref<1x128xf32, #tpu.memory_space<vmem>>, vector<1x128xf32>
    %12 = vector.broadcast %11 : vector<1x128xf32> to vector<16x128xf32>
    %13 = arith.addf %10, %12 : vector<16x128xf32>
    %cst_7 = arith.constant 0.000000e+00 : f32
    %14 = vector.broadcast %cst_7 : f32 to vector<2x32xf32>
    %cst_8 = arith.constant 0.000000e+00 : f32
    %15 = vector.broadcast %cst_8 : f32 to vector<2x32xf32>
    %16 = vector.extract_strided_slice %13 {offsets = [0, 0], sizes = [2, 128], strides = [1, 1]} : vector<16x128xf32> to vector<2x128xf32>
    %17 = arith.truncf %14 : vector<2x32xf32> to vector<2x32xbf16>
    %cst_9 = arith.constant dense<0.000000e+00> : vector<2x128xf32>
    %18 = tpu.matmul %17, %7, %cst_9 {dimension_numbers = #tpu.dot_dimension_numbers<[1], [0], [0], [1], [0, 0, 1, 1], [], []>} : vector<2x32xbf16>, vector<32x128xbf16>, vector<2x128xf32> -> vector<2x128xf32>
    %19 = arith.addf %16, %18 : vector<2x128xf32>
    %20 = math.tanh %19 : vector<2x128xf32>
    %21 = arith.negf %19 : vector<2x128xf32>
    %22 = math.exp %21 : vector<2x128xf32>
    %cst_10 = arith.constant 1.000000e+00 : f32
    %23 = vector.broadcast %cst_10 : f32 to vector<2x128xf32>
    %24 = arith.addf %23, %22 : vector<2x128xf32>
    %25 = arith.divf %23, %24 : vector<2x128xf32>
    %26 = arith.select %5, %20, %25 : vector<2x128xi1>, vector<2x128xf32>
    %27 = vector.extract_strided_slice %26 {offsets = [0, 0], sizes = [2, 32], strides = [1, 1]} : vector<2x128xf32> to vector<2x32xf32>
    %28 = vector.extract_strided_slice %26 {offsets = [0, 32], sizes = [2, 32], strides = [1, 1]} : vector<2x128xf32> to vector<2x32xf32>
    %29 = vector.extract_strided_slice %26 {offsets = [0, 64], sizes = [2, 32], strides = [1, 1]} : vector<2x128xf32> to vector<2x32xf32>
    %30 = vector.extract_strided_slice %26 {offsets = [0, 96], sizes = [2, 32], strides = [1, 1]} : vector<2x128xf32> to vector<2x32xf32>
    %31 = arith.mulf %28, %15 : vector<2x32xf32>
    %32 = arith.mulf %27, %29 : vector<2x32xf32>
    %33 = arith.addf %31, %32 : vector<2x32xf32>
    %34 = math.tanh %33 : vector<2x32xf32>
    %35 = arith.mulf %30, %34 : vector<2x32xf32>
    %c0_11 = arith.constant 0 : index
    %c0_12 = arith.constant 0 : index
    %36 = vector.load %arg10[%c0_11, %c0_12] : memref<16x32xf32, #tpu.memory_space<vmem>>, vector<2x32xf32>
    tpu.vector_store %arg10[%c0_11, %c0_12], %35 {strides = array<i32>} : memref<16x32xf32, #tpu.memory_space<vmem>>, vector<2x32xf32>,
    %37 = vector.extract_strided_slice %13 {offsets = [2, 0], sizes = [2, 128], strides = [1, 1]} : vector<16x128xf32> to vector<2x128xf32>
    %38 = arith.truncf %35 : vector<2x32xf32> to vector<2x32xbf16>
    %cst_13 = arith.constant dense<0.000000e+00> : vector<2x128xf32>
    %39 = tpu.matmul %38, %7, %cst_13 {dimension_numbers = #tpu.dot_dimension_numbers<[1], [0], [0], [1], [0, 0, 1, 1], [], []>} : vector<2x32xbf16>, vector<32x128xbf16>, vector<2x128xf32> -> vector<2x128xf32>
    %40 = arith.addf %37, %39 : vector<2x128xf32>
    %41 = math.tanh %40 : vector<2x128xf32>
    %42 = arith.negf %40 : vector<2x128xf32>
    %43 = math.exp %42 : vector<2x128xf32>
    %cst_14 = arith.constant 1.000000e+00 : f32
    %44 = vector.broadcast %cst_14 : f32 to vector<2x128xf32>
    %45 = arith.addf %44, %43 : vector<2x128xf32>
    %46 = arith.divf %44, %45 : vector<2x128xf32>
    %47 = arith.select %5, %41, %46 : vector<2x128xi1>, vector<2x128xf32>
    %48 = vector.extract_strided_slice %47 {offsets = [0, 0], sizes = [2, 32], strides = [1, 1]} : vector<2x128xf32> to vector<2x32xf32>
    %49 = vector.extract_strided_slice %47 {offsets = [0, 32], sizes = [2, 32], strides = [1, 1]} : vector<2x128xf32> to vector<2x32xf32>
    %50 = vector.extract_strided_slice %47 {offsets = [0, 64], sizes = [2, 32], strides = [1, 1]} : vector<2x128xf32> to vector<2x32xf32>
    %51 = vector.extract_strided_slice %47 {offsets = [0, 96], sizes = [2, 32], strides = [1, 1]} : vector<2x128xf32> to vector<2x32xf32>
    %52 = arith.mulf %49, %33 : vector<2x32xf32>
    %53 = arith.mulf %48, %50 : vector<2x32xf32>
    %54 = arith.addf %52, %53 : vector<2x32xf32>
    %55 = math.tanh %54 : vector<2x32xf32>
    %56 = arith.mulf %51, %55 : vector<2x32xf32>
    %c2 = arith.constant 2 : index
    %c0_15 = arith.constant 0 : index
    %57 = vector.load %arg10[%c2, %c0_15] : memref<16x32xf32, #tpu.memory_space<vmem>>, vector<2x32xf32>
    tpu.vector_store %arg10[%c2, %c0_15], %56 {strides = array<i32>} : memref<16x32xf32, #tpu.memory_space<vmem>>, vector<2x32xf32>,
    %58 = vector.extract_strided_slice %13 {offsets = [4, 0], sizes = [2, 128], strides = [1, 1]} : vector<16x128xf32> to vector<2x128xf32>
    %59 = arith.truncf %56 : vector<2x32xf32> to vector<2x32xbf16>
    %cst_16 = arith.constant dense<0.000000e+00> : vector<2x128xf32>
    %60 = tpu.matmul %59, %7, %cst_16 {dimension_numbers = #tpu.dot_dimension_numbers<[1], [0], [0], [1], [0, 0, 1, 1], [], []>} : vector<2x32xbf16>, vector<32x128xbf16>, vector<2x128xf32> -> vector<2x128xf32>
    %61 = arith.addf %58, %60 : vector<2x128xf32>
    %62 = math.tanh %61 : vector<2x128xf32>
    %63 = arith.negf %61 : vector<2x128xf32>
    %64 = math.exp %63 : vector<2x128xf32>
    %cst_17 = arith.constant 1.000000e+00 : f32
    %65 = vector.broadcast %cst_17 : f32 to vector<2x128xf32>
    %66 = arith.addf %65, %64 : vector<2x128xf32>
    %67 = arith.divf %65, %66 : vector<2x128xf32>
    %68 = arith.select %5, %62, %67 : vector<2x128xi1>, vector<2x128xf32>
    %69 = vector.extract_strided_slice %68 {offsets = [0, 0], sizes = [2, 32], strides = [1, 1]} : vector<2x128xf32> to vector<2x32xf32>
    %70 = vector.extract_strided_slice %68 {offsets = [0, 32], sizes = [2, 32], strides = [1, 1]} : vector<2x128xf32> to vector<2x32xf32>
    %71 = vector.extract_strided_slice %68 {offsets = [0, 64], sizes = [2, 32], strides = [1, 1]} : vector<2x128xf32> to vector<2x32xf32>
    %72 = vector.extract_strided_slice %68 {offsets = [0, 96], sizes = [2, 32], strides = [1, 1]} : vector<2x128xf32> to vector<2x32xf32>
    %73 = arith.mulf %70, %54 : vector<2x32xf32>
    %74 = arith.mulf %69, %71 : vector<2x32xf32>
    %75 = arith.addf %73, %74 : vector<2x32xf32>
    %76 = math.tanh %75 : vector<2x32xf32>
    %77 = arith.mulf %72, %76 : vector<2x32xf32>
    %c4 = arith.constant 4 : index
    %c0_18 = arith.constant 0 : index
    %78 = vector.load %arg10[%c4, %c0_18] : memref<16x32xf32, #tpu.memory_space<vmem>>, vector<2x32xf32>
    tpu.vector_store %arg10[%c4, %c0_18], %77 {strides = array<i32>} : memref<16x32xf32, #tpu.memory_space<vmem>>, vector<2x32xf32>,
    %79 = vector.extract_strided_slice %13 {offsets = [6, 0], sizes = [2, 128], strides = [1, 1]} : vector<16x128xf32> to vector<2x128xf32>
    %80 = arith.truncf %77 : vector<2x32xf32> to vector<2x32xbf16>
    %cst_19 = arith.constant dense<0.000000e+00> : vector<2x128xf32>
    %81 = tpu.matmul %80, %7, %cst_19 {dimension_numbers = #tpu.dot_dimension_numbers<[1], [0], [0], [1], [0, 0, 1, 1], [], []>} : vector<2x32xbf16>, vector<32x128xbf16>, vector<2x128xf32> -> vector<2x128xf32>
    %82 = arith.addf %79, %81 : vector<2x128xf32>
    %83 = math.tanh %82 : vector<2x128xf32>
    %84 = arith.negf %82 : vector<2x128xf32>
    %85 = math.exp %84 : vector<2x128xf32>
    %cst_20 = arith.constant 1.000000e+00 : f32
    %86 = vector.broadcast %cst_20 : f32 to vector<2x128xf32>
    %87 = arith.addf %86, %85 : vector<2x128xf32>
    %88 = arith.divf %86, %87 : vector<2x128xf32>
    %89 = arith.select %5, %83, %88 : vector<2x128xi1>, vector<2x128xf32>
    %90 = vector.extract_strided_slice %89 {offsets = [0, 0], sizes = [2, 32], strides = [1, 1]} : vector<2x128xf32> to vector<2x32xf32>
    %91 = vector.extract_strided_slice %89 {offsets = [0, 32], sizes = [2, 32], strides = [1, 1]} : vector<2x128xf32> to vector<2x32xf32>
    %92 = vector.extract_strided_slice %89 {offsets = [0, 64], sizes = [2, 32], strides = [1, 1]} : vector<2x128xf32> to vector<2x32xf32>
    %93 = vector.extract_strided_slice %89 {offsets = [0, 96], sizes = [2, 32], strides = [1, 1]} : vector<2x128xf32> to vector<2x32xf32>
    %94 = arith.mulf %91, %75 : vector<2x32xf32>
    %95 = arith.mulf %90, %92 : vector<2x32xf32>
    %96 = arith.addf %94, %95 : vector<2x32xf32>
    %97 = math.tanh %96 : vector<2x32xf32>
    %98 = arith.mulf %93, %97 : vector<2x32xf32>
    %c6 = arith.constant 6 : index
    %c0_21 = arith.constant 0 : index
    %99 = vector.load %arg10[%c6, %c0_21] : memref<16x32xf32, #tpu.memory_space<vmem>>, vector<2x32xf32>
    tpu.vector_store %arg10[%c6, %c0_21], %98 {strides = array<i32>} : memref<16x32xf32, #tpu.memory_space<vmem>>, vector<2x32xf32>,
    %100 = vector.extract_strided_slice %13 {offsets = [8, 0], sizes = [2, 128], strides = [1, 1]} : vector<16x128xf32> to vector<2x128xf32>
    %101 = arith.truncf %98 : vector<2x32xf32> to vector<2x32xbf16>
    %cst_22 = arith.constant dense<0.000000e+00> : vector<2x128xf32>
    %102 = tpu.matmul %101, %7, %cst_22 {dimension_numbers = #tpu.dot_dimension_numbers<[1], [0], [0], [1], [0, 0, 1, 1], [], []>} : vector<2x32xbf16>, vector<32x128xbf16>, vector<2x128xf32> -> vector<2x128xf32>
    %103 = arith.addf %100, %102 : vector<2x128xf32>
    %104 = math.tanh %103 : vector<2x128xf32>
    %105 = arith.negf %103 : vector<2x128xf32>
    %106 = math.exp %105 : vector<2x128xf32>
    %cst_23 = arith.constant 1.000000e+00 : f32
    %107 = vector.broadcast %cst_23 : f32 to vector<2x128xf32>
    %108 = arith.addf %107, %106 : vector<2x128xf32>
    %109 = arith.divf %107, %108 : vector<2x128xf32>
    %110 = arith.select %5, %104, %109 : vector<2x128xi1>, vector<2x128xf32>
    %111 = vector.extract_strided_slice %110 {offsets = [0, 0], sizes = [2, 32], strides = [1, 1]} : vector<2x128xf32> to vector<2x32xf32>
    %112 = vector.extract_strided_slice %110 {offsets = [0, 32], sizes = [2, 32], strides = [1, 1]} : vector<2x128xf32> to vector<2x32xf32>
    %113 = vector.extract_strided_slice %110 {offsets = [0, 64], sizes = [2, 32], strides = [1, 1]} : vector<2x128xf32> to vector<2x32xf32>
    %114 = vector.extract_strided_slice %110 {offsets = [0, 96], sizes = [2, 32], strides = [1, 1]} : vector<2x128xf32> to vector<2x32xf32>
    %115 = arith.mulf %112, %96 : vector<2x32xf32>
    %116 = arith.mulf %111, %113 : vector<2x32xf32>
    %117 = arith.addf %115, %116 : vector<2x32xf32>
    %118 = math.tanh %117 : vector<2x32xf32>
    %119 = arith.mulf %114, %118 : vector<2x32xf32>
    %c8 = arith.constant 8 : index
    %c0_24 = arith.constant 0 : index
    %120 = vector.load %arg10[%c8, %c0_24] : memref<16x32xf32, #tpu.memory_space<vmem>>, vector<2x32xf32>
    tpu.vector_store %arg10[%c8, %c0_24], %119 {strides = array<i32>} : memref<16x32xf32, #tpu.memory_space<vmem>>, vector<2x32xf32>,
    %121 = vector.extract_strided_slice %13 {offsets = [10, 0], sizes = [2, 128], strides = [1, 1]} : vector<16x128xf32> to vector<2x128xf32>
    %122 = arith.truncf %119 : vector<2x32xf32> to vector<2x32xbf16>
    %cst_25 = arith.constant dense<0.000000e+00> : vector<2x128xf32>
    %123 = tpu.matmul %122, %7, %cst_25 {dimension_numbers = #tpu.dot_dimension_numbers<[1], [0], [0], [1], [0, 0, 1, 1], [], []>} : vector<2x32xbf16>, vector<32x128xbf16>, vector<2x128xf32> -> vector<2x128xf32>
    %124 = arith.addf %121, %123 : vector<2x128xf32>
    %125 = math.tanh %124 : vector<2x128xf32>
    %126 = arith.negf %124 : vector<2x128xf32>
    %127 = math.exp %126 : vector<2x128xf32>
    %cst_26 = arith.constant 1.000000e+00 : f32
    %128 = vector.broadcast %cst_26 : f32 to vector<2x128xf32>
    %129 = arith.addf %128, %127 : vector<2x128xf32>
    %130 = arith.divf %128, %129 : vector<2x128xf32>
    %131 = arith.select %5, %125, %130 : vector<2x128xi1>, vector<2x128xf32>
    %132 = vector.extract_strided_slice %131 {offsets = [0, 0], sizes = [2, 32], strides = [1, 1]} : vector<2x128xf32> to vector<2x32xf32>
    %133 = vector.extract_strided_slice %131 {offsets = [0, 32], sizes = [2, 32], strides = [1, 1]} : vector<2x128xf32> to vector<2x32xf32>
    %134 = vector.extract_strided_slice %131 {offsets = [0, 64], sizes = [2, 32], strides = [1, 1]} : vector<2x128xf32> to vector<2x32xf32>
    %135 = vector.extract_strided_slice %131 {offsets = [0, 96], sizes = [2, 32], strides = [1, 1]} : vector<2x128xf32> to vector<2x32xf32>
    %136 = arith.mulf %133, %117 : vector<2x32xf32>
    %137 = arith.mulf %132, %134 : vector<2x32xf32>
    %138 = arith.addf %136, %137 : vector<2x32xf32>
    %139 = math.tanh %138 : vector<2x32xf32>
    %140 = arith.mulf %135, %139 : vector<2x32xf32>
    %c10 = arith.constant 10 : index
    %c0_27 = arith.constant 0 : index
    %141 = vector.load %arg10[%c10, %c0_27] : memref<16x32xf32, #tpu.memory_space<vmem>>, vector<2x32xf32>
    tpu.vector_store %arg10[%c10, %c0_27], %140 {strides = array<i32>} : memref<16x32xf32, #tpu.memory_space<vmem>>, vector<2x32xf32>,
    %142 = vector.extract_strided_slice %13 {offsets = [12, 0], sizes = [2, 128], strides = [1, 1]} : vector<16x128xf32> to vector<2x128xf32>
    %143 = arith.truncf %140 : vector<2x32xf32> to vector<2x32xbf16>
    %cst_28 = arith.constant dense<0.000000e+00> : vector<2x128xf32>
    %144 = tpu.matmul %143, %7, %cst_28 {dimension_numbers = #tpu.dot_dimension_numbers<[1], [0], [0], [1], [0, 0, 1, 1], [], []>} : vector<2x32xbf16>, vector<32x128xbf16>, vector<2x128xf32> -> vector<2x128xf32>
    %145 = arith.addf %142, %144 : vector<2x128xf32>
    %146 = math.tanh %145 : vector<2x128xf32>
    %147 = arith.negf %145 : vector<2x128xf32>
    %148 = math.exp %147 : vector<2x128xf32>
    %cst_29 = arith.constant 1.000000e+00 : f32
    %149 = vector.broadcast %cst_29 : f32 to vector<2x128xf32>
    %150 = arith.addf %149, %148 : vector<2x128xf32>
    %151 = arith.divf %149, %150 : vector<2x128xf32>
    %152 = arith.select %5, %146, %151 : vector<2x128xi1>, vector<2x128xf32>
    %153 = vector.extract_strided_slice %152 {offsets = [0, 0], sizes = [2, 32], strides = [1, 1]} : vector<2x128xf32> to vector<2x32xf32>
    %154 = vector.extract_strided_slice %152 {offsets = [0, 32], sizes = [2, 32], strides = [1, 1]} : vector<2x128xf32> to vector<2x32xf32>
    %155 = vector.extract_strided_slice %152 {offsets = [0, 64], sizes = [2, 32], strides = [1, 1]} : vector<2x128xf32> to vector<2x32xf32>
    %156 = vector.extract_strided_slice %152 {offsets = [0, 96], sizes = [2, 32], strides = [1, 1]} : vector<2x128xf32> to vector<2x32xf32>
    %157 = arith.mulf %154, %138 : vector<2x32xf32>
    %158 = arith.mulf %153, %155 : vector<2x32xf32>
    %159 = arith.addf %157, %158 : vector<2x32xf32>
    %160 = math.tanh %159 : vector<2x32xf32>
    %161 = arith.mulf %156, %160 : vector<2x32xf32>
    %c12 = arith.constant 12 : index
    %c0_30 = arith.constant 0 : index
    %162 = vector.load %arg10[%c12, %c0_30] : memref<16x32xf32, #tpu.memory_space<vmem>>, vector<2x32xf32>
    tpu.vector_store %arg10[%c12, %c0_30], %161 {strides = array<i32>} : memref<16x32xf32, #tpu.memory_space<vmem>>, vector<2x32xf32>,
    %163 = vector.extract_strided_slice %13 {offsets = [14, 0], sizes = [2, 128], strides = [1, 1]} : vector<16x128xf32> to vector<2x128xf32>
    %164 = arith.truncf %161 : vector<2x32xf32> to vector<2x32xbf16>
    %cst_31 = arith.constant dense<0.000000e+00> : vector<2x128xf32>
    %165 = tpu.matmul %164, %7, %cst_31 {dimension_numbers = #tpu.dot_dimension_numbers<[1], [0], [0], [1], [0, 0, 1, 1], [], []>} : vector<2x32xbf16>, vector<32x128xbf16>, vector<2x128xf32> -> vector<2x128xf32>
    %166 = arith.addf %163, %165 : vector<2x128xf32>
    %167 = math.tanh %166 : vector<2x128xf32>
    %168 = arith.negf %166 : vector<2x128xf32>
    %169 = math.exp %168 : vector<2x128xf32>
    %cst_32 = arith.constant 1.000000e+00 : f32
    %170 = vector.broadcast %cst_32 : f32 to vector<2x128xf32>
    %171 = arith.addf %170, %169 : vector<2x128xf32>
    %172 = arith.divf %170, %171 : vector<2x128xf32>
    %173 = arith.select %5, %167, %172 : vector<2x128xi1>, vector<2x128xf32>
    %174 = vector.extract_strided_slice %173 {offsets = [0, 0], sizes = [2, 32], strides = [1, 1]} : vector<2x128xf32> to vector<2x32xf32>
    %175 = vector.extract_strided_slice %173 {offsets = [0, 32], sizes = [2, 32], strides = [1, 1]} : vector<2x128xf32> to vector<2x32xf32>
    %176 = vector.extract_strided_slice %173 {offsets = [0, 64], sizes = [2, 32], strides = [1, 1]} : vector<2x128xf32> to vector<2x32xf32>
    %177 = vector.extract_strided_slice %173 {offsets = [0, 96], sizes = [2, 32], strides = [1, 1]} : vector<2x128xf32> to vector<2x32xf32>
    %178 = arith.mulf %175, %159 : vector<2x32xf32>
    %179 = arith.mulf %174, %176 : vector<2x32xf32>
    %180 = arith.addf %178, %179 : vector<2x32xf32>
    %181 = math.tanh %180 : vector<2x32xf32>
    %182 = arith.mulf %177, %181 : vector<2x32xf32>
    %c14 = arith.constant 14 : index
    %c0_33 = arith.constant 0 : index
    %183 = vector.load %arg10[%c14, %c0_33] : memref<16x32xf32, #tpu.memory_space<vmem>>, vector<2x32xf32>
    tpu.vector_store %arg10[%c14, %c0_33], %182 {strides = array<i32>} : memref<16x32xf32, #tpu.memory_space<vmem>>, vector<2x32xf32>,
    %c0_34 = arith.constant 0 : index
    %c0_35 = arith.constant 0 : index
    %184 = vector.load %arg4[%c0_34, %c0_35] : memref<32x128xbf16, #tpu.memory_space<vmem>>, vector<32x128xbf16>
    %c0_36 = arith.constant 0 : index
    %c0_37 = arith.constant 0 : index
    %185 = vector.load %arg5[%c0_36, %c0_37] : memref<32x128xbf16, #tpu.memory_space<vmem>>, vector<32x128xbf16>
    %c0_38 = arith.constant 0 : index
    %c0_39 = arith.constant 0 : index
    %186 = vector.load %arg10[%c0_38, %c0_39] : memref<16x32xf32, #tpu.memory_space<vmem>>, vector<16x32xf32>
    %187 = arith.truncf %186 : vector<16x32xf32> to vector<16x32xbf16>
    %cst_40 = arith.constant dense<0.000000e+00> : vector<16x128xf32>
    %188 = tpu.matmul %187, %184, %cst_40 {dimension_numbers = #tpu.dot_dimension_numbers<[1], [0], [0], [1], [0, 0, 1, 1], [], []>} : vector<16x32xbf16>, vector<32x128xbf16>, vector<16x128xf32> -> vector<16x128xf32>
    %c0_41 = arith.constant 0 : index
    %c0_42 = arith.constant 0 : index
    %189 = vector.load %arg6[%c0_41, %c0_42] : memref<1x128xf32, #tpu.memory_space<vmem>>, vector<1x128xf32>
    %190 = vector.broadcast %189 : vector<1x128xf32> to vector<16x128xf32>
    %191 = arith.addf %188, %190 : vector<16x128xf32>
    %cst_43 = arith.constant 0.000000e+00 : f32
    %192 = vector.broadcast %cst_43 : f32 to vector<2x32xf32>
    %cst_44 = arith.constant 0.000000e+00 : f32
    %193 = vector.broadcast %cst_44 : f32 to vector<2x32xf32>
    %194 = vector.extract_strided_slice %191 {offsets = [0, 0], sizes = [2, 128], strides = [1, 1]} : vector<16x128xf32> to vector<2x128xf32>
    %195 = arith.truncf %192 : vector<2x32xf32> to vector<2x32xbf16>
    %cst_45 = arith.constant dense<0.000000e+00> : vector<2x128xf32>
    %196 = tpu.matmul %195, %185, %cst_45 {dimension_numbers = #tpu.dot_dimension_numbers<[1], [0], [0], [1], [0, 0, 1, 1], [], []>} : vector<2x32xbf16>, vector<32x128xbf16>, vector<2x128xf32> -> vector<2x128xf32>
    %197 = arith.addf %194, %196 : vector<2x128xf32>
    %198 = math.tanh %197 : vector<2x128xf32>
    %199 = arith.negf %197 : vector<2x128xf32>
    %200 = math.exp %199 : vector<2x128xf32>
    %cst_46 = arith.constant 1.000000e+00 : f32
    %201 = vector.broadcast %cst_46 : f32 to vector<2x128xf32>
    %202 = arith.addf %201, %200 : vector<2x128xf32>
    %203 = arith.divf %201, %202 : vector<2x128xf32>
    %204 = arith.select %5, %198, %203 : vector<2x128xi1>, vector<2x128xf32>
    %205 = vector.extract_strided_slice %204 {offsets = [0, 0], sizes = [2, 32], strides = [1, 1]} : vector<2x128xf32> to vector<2x32xf32>
    %206 = vector.extract_strided_slice %204 {offsets = [0, 32], sizes = [2, 32], strides = [1, 1]} : vector<2x128xf32> to vector<2x32xf32>
    %207 = vector.extract_strided_slice %204 {offsets = [0, 64], sizes = [2, 32], strides = [1, 1]} : vector<2x128xf32> to vector<2x32xf32>
    %208 = vector.extract_strided_slice %204 {offsets = [0, 96], sizes = [2, 32], strides = [1, 1]} : vector<2x128xf32> to vector<2x32xf32>
    %209 = arith.mulf %206, %193 : vector<2x32xf32>
    %210 = arith.mulf %205, %207 : vector<2x32xf32>
    %211 = arith.addf %209, %210 : vector<2x32xf32>
    %212 = math.tanh %211 : vector<2x32xf32>
    %213 = arith.mulf %208, %212 : vector<2x32xf32>
    %214 = vector.extract_strided_slice %191 {offsets = [2, 0], sizes = [2, 128], strides = [1, 1]} : vector<16x128xf32> to vector<2x128xf32>
    %215 = arith.truncf %213 : vector<2x32xf32> to vector<2x32xbf16>
    %cst_47 = arith.constant dense<0.000000e+00> : vector<2x128xf32>
    %216 = tpu.matmul %215, %185, %cst_47 {dimension_numbers = #tpu.dot_dimension_numbers<[1], [0], [0], [1], [0, 0, 1, 1], [], []>} : vector<2x32xbf16>, vector<32x128xbf16>, vector<2x128xf32> -> vector<2x128xf32>
    %217 = arith.addf %214, %216 : vector<2x128xf32>
    %218 = math.tanh %217 : vector<2x128xf32>
    %219 = arith.negf %217 : vector<2x128xf32>
    %220 = math.exp %219 : vector<2x128xf32>
    %cst_48 = arith.constant 1.000000e+00 : f32
    %221 = vector.broadcast %cst_48 : f32 to vector<2x128xf32>
    %222 = arith.addf %221, %220 : vector<2x128xf32>
    %223 = arith.divf %221, %222 : vector<2x128xf32>
    %224 = arith.select %5, %218, %223 : vector<2x128xi1>, vector<2x128xf32>
    %225 = vector.extract_strided_slice %224 {offsets = [0, 0], sizes = [2, 32], strides = [1, 1]} : vector<2x128xf32> to vector<2x32xf32>
    %226 = vector.extract_strided_slice %224 {offsets = [0, 32], sizes = [2, 32], strides = [1, 1]} : vector<2x128xf32> to vector<2x32xf32>
    %227 = vector.extract_strided_slice %224 {offsets = [0, 64], sizes = [2, 32], strides = [1, 1]} : vector<2x128xf32> to vector<2x32xf32>
    %228 = vector.extract_strided_slice %224 {offsets = [0, 96], sizes = [2, 32], strides = [1, 1]} : vector<2x128xf32> to vector<2x32xf32>
    %229 = arith.mulf %226, %211 : vector<2x32xf32>
    %230 = arith.mulf %225, %227 : vector<2x32xf32>
    %231 = arith.addf %229, %230 : vector<2x32xf32>
    %232 = math.tanh %231 : vector<2x32xf32>
    %233 = arith.mulf %228, %232 : vector<2x32xf32>
    %234 = vector.extract_strided_slice %191 {offsets = [4, 0], sizes = [2, 128], strides = [1, 1]} : vector<16x128xf32> to vector<2x128xf32>
    %235 = arith.truncf %233 : vector<2x32xf32> to vector<2x32xbf16>
    %cst_49 = arith.constant dense<0.000000e+00> : vector<2x128xf32>
    %236 = tpu.matmul %235, %185, %cst_49 {dimension_numbers = #tpu.dot_dimension_numbers<[1], [0], [0], [1], [0, 0, 1, 1], [], []>} : vector<2x32xbf16>, vector<32x128xbf16>, vector<2x128xf32> -> vector<2x128xf32>
    %237 = arith.addf %234, %236 : vector<2x128xf32>
    %238 = math.tanh %237 : vector<2x128xf32>
    %239 = arith.negf %237 : vector<2x128xf32>
    %240 = math.exp %239 : vector<2x128xf32>
    %cst_50 = arith.constant 1.000000e+00 : f32
    %241 = vector.broadcast %cst_50 : f32 to vector<2x128xf32>
    %242 = arith.addf %241, %240 : vector<2x128xf32>
    %243 = arith.divf %241, %242 : vector<2x128xf32>
    %244 = arith.select %5, %238, %243 : vector<2x128xi1>, vector<2x128xf32>
    %245 = vector.extract_strided_slice %244 {offsets = [0, 0], sizes = [2, 32], strides = [1, 1]} : vector<2x128xf32> to vector<2x32xf32>
    %246 = vector.extract_strided_slice %244 {offsets = [0, 32], sizes = [2, 32], strides = [1, 1]} : vector<2x128xf32> to vector<2x32xf32>
    %247 = vector.extract_strided_slice %244 {offsets = [0, 64], sizes = [2, 32], strides = [1, 1]} : vector<2x128xf32> to vector<2x32xf32>
    %248 = vector.extract_strided_slice %244 {offsets = [0, 96], sizes = [2, 32], strides = [1, 1]} : vector<2x128xf32> to vector<2x32xf32>
    %249 = arith.mulf %246, %231 : vector<2x32xf32>
    %250 = arith.mulf %245, %247 : vector<2x32xf32>
    %251 = arith.addf %249, %250 : vector<2x32xf32>
    %252 = math.tanh %251 : vector<2x32xf32>
    %253 = arith.mulf %248, %252 : vector<2x32xf32>
    %254 = vector.extract_strided_slice %191 {offsets = [6, 0], sizes = [2, 128], strides = [1, 1]} : vector<16x128xf32> to vector<2x128xf32>
    %255 = arith.truncf %253 : vector<2x32xf32> to vector<2x32xbf16>
    %cst_51 = arith.constant dense<0.000000e+00> : vector<2x128xf32>
    %256 = tpu.matmul %255, %185, %cst_51 {dimension_numbers = #tpu.dot_dimension_numbers<[1], [0], [0], [1], [0, 0, 1, 1], [], []>} : vector<2x32xbf16>, vector<32x128xbf16>, vector<2x128xf32> -> vector<2x128xf32>
    %257 = arith.addf %254, %256 : vector<2x128xf32>
    %258 = math.tanh %257 : vector<2x128xf32>
    %259 = arith.negf %257 : vector<2x128xf32>
    %260 = math.exp %259 : vector<2x128xf32>
    %cst_52 = arith.constant 1.000000e+00 : f32
    %261 = vector.broadcast %cst_52 : f32 to vector<2x128xf32>
    %262 = arith.addf %261, %260 : vector<2x128xf32>
    %263 = arith.divf %261, %262 : vector<2x128xf32>
    %264 = arith.select %5, %258, %263 : vector<2x128xi1>, vector<2x128xf32>
    %265 = vector.extract_strided_slice %264 {offsets = [0, 0], sizes = [2, 32], strides = [1, 1]} : vector<2x128xf32> to vector<2x32xf32>
    %266 = vector.extract_strided_slice %264 {offsets = [0, 32], sizes = [2, 32], strides = [1, 1]} : vector<2x128xf32> to vector<2x32xf32>
    %267 = vector.extract_strided_slice %264 {offsets = [0, 64], sizes = [2, 32], strides = [1, 1]} : vector<2x128xf32> to vector<2x32xf32>
    %268 = vector.extract_strided_slice %264 {offsets = [0, 96], sizes = [2, 32], strides = [1, 1]} : vector<2x128xf32> to vector<2x32xf32>
    %269 = arith.mulf %266, %251 : vector<2x32xf32>
    %270 = arith.mulf %265, %267 : vector<2x32xf32>
    %271 = arith.addf %269, %270 : vector<2x32xf32>
    %272 = math.tanh %271 : vector<2x32xf32>
    %273 = arith.mulf %268, %272 : vector<2x32xf32>
    %274 = vector.extract_strided_slice %191 {offsets = [8, 0], sizes = [2, 128], strides = [1, 1]} : vector<16x128xf32> to vector<2x128xf32>
    %275 = arith.truncf %273 : vector<2x32xf32> to vector<2x32xbf16>
    %cst_53 = arith.constant dense<0.000000e+00> : vector<2x128xf32>
    %276 = tpu.matmul %275, %185, %cst_53 {dimension_numbers = #tpu.dot_dimension_numbers<[1], [0], [0], [1], [0, 0, 1, 1], [], []>} : vector<2x32xbf16>, vector<32x128xbf16>, vector<2x128xf32> -> vector<2x128xf32>
    %277 = arith.addf %274, %276 : vector<2x128xf32>
    %278 = math.tanh %277 : vector<2x128xf32>
    %279 = arith.negf %277 : vector<2x128xf32>
    %280 = math.exp %279 : vector<2x128xf32>
    %cst_54 = arith.constant 1.000000e+00 : f32
    %281 = vector.broadcast %cst_54 : f32 to vector<2x128xf32>
    %282 = arith.addf %281, %280 : vector<2x128xf32>
    %283 = arith.divf %281, %282 : vector<2x128xf32>
    %284 = arith.select %5, %278, %283 : vector<2x128xi1>, vector<2x128xf32>
    %285 = vector.extract_strided_slice %284 {offsets = [0, 0], sizes = [2, 32], strides = [1, 1]} : vector<2x128xf32> to vector<2x32xf32>
    %286 = vector.extract_strided_slice %284 {offsets = [0, 32], sizes = [2, 32], strides = [1, 1]} : vector<2x128xf32> to vector<2x32xf32>
    %287 = vector.extract_strided_slice %284 {offsets = [0, 64], sizes = [2, 32], strides = [1, 1]} : vector<2x128xf32> to vector<2x32xf32>
    %288 = vector.extract_strided_slice %284 {offsets = [0, 96], sizes = [2, 32], strides = [1, 1]} : vector<2x128xf32> to vector<2x32xf32>
    %289 = arith.mulf %286, %271 : vector<2x32xf32>
    %290 = arith.mulf %285, %287 : vector<2x32xf32>
    %291 = arith.addf %289, %290 : vector<2x32xf32>
    %292 = math.tanh %291 : vector<2x32xf32>
    %293 = arith.mulf %288, %292 : vector<2x32xf32>
    %294 = vector.extract_strided_slice %191 {offsets = [10, 0], sizes = [2, 128], strides = [1, 1]} : vector<16x128xf32> to vector<2x128xf32>
    %295 = arith.truncf %293 : vector<2x32xf32> to vector<2x32xbf16>
    %cst_55 = arith.constant dense<0.000000e+00> : vector<2x128xf32>
    %296 = tpu.matmul %295, %185, %cst_55 {dimension_numbers = #tpu.dot_dimension_numbers<[1], [0], [0], [1], [0, 0, 1, 1], [], []>} : vector<2x32xbf16>, vector<32x128xbf16>, vector<2x128xf32> -> vector<2x128xf32>
    %297 = arith.addf %294, %296 : vector<2x128xf32>
    %298 = math.tanh %297 : vector<2x128xf32>
    %299 = arith.negf %297 : vector<2x128xf32>
    %300 = math.exp %299 : vector<2x128xf32>
    %cst_56 = arith.constant 1.000000e+00 : f32
    %301 = vector.broadcast %cst_56 : f32 to vector<2x128xf32>
    %302 = arith.addf %301, %300 : vector<2x128xf32>
    %303 = arith.divf %301, %302 : vector<2x128xf32>
    %304 = arith.select %5, %298, %303 : vector<2x128xi1>, vector<2x128xf32>
    %305 = vector.extract_strided_slice %304 {offsets = [0, 0], sizes = [2, 32], strides = [1, 1]} : vector<2x128xf32> to vector<2x32xf32>
    %306 = vector.extract_strided_slice %304 {offsets = [0, 32], sizes = [2, 32], strides = [1, 1]} : vector<2x128xf32> to vector<2x32xf32>
    %307 = vector.extract_strided_slice %304 {offsets = [0, 64], sizes = [2, 32], strides = [1, 1]} : vector<2x128xf32> to vector<2x32xf32>
    %308 = vector.extract_strided_slice %304 {offsets = [0, 96], sizes = [2, 32], strides = [1, 1]} : vector<2x128xf32> to vector<2x32xf32>
    %309 = arith.mulf %306, %291 : vector<2x32xf32>
    %310 = arith.mulf %305, %307 : vector<2x32xf32>
    %311 = arith.addf %309, %310 : vector<2x32xf32>
    %312 = math.tanh %311 : vector<2x32xf32>
    %313 = arith.mulf %308, %312 : vector<2x32xf32>
    %314 = vector.extract_strided_slice %191 {offsets = [12, 0], sizes = [2, 128], strides = [1, 1]} : vector<16x128xf32> to vector<2x128xf32>
    %315 = arith.truncf %313 : vector<2x32xf32> to vector<2x32xbf16>
    %cst_57 = arith.constant dense<0.000000e+00> : vector<2x128xf32>
    %316 = tpu.matmul %315, %185, %cst_57 {dimension_numbers = #tpu.dot_dimension_numbers<[1], [0], [0], [1], [0, 0, 1, 1], [], []>} : vector<2x32xbf16>, vector<32x128xbf16>, vector<2x128xf32> -> vector<2x128xf32>
    %317 = arith.addf %314, %316 : vector<2x128xf32>
    %318 = math.tanh %317 : vector<2x128xf32>
    %319 = arith.negf %317 : vector<2x128xf32>
    %320 = math.exp %319 : vector<2x128xf32>
    %cst_58 = arith.constant 1.000000e+00 : f32
    %321 = vector.broadcast %cst_58 : f32 to vector<2x128xf32>
    %322 = arith.addf %321, %320 : vector<2x128xf32>
    %323 = arith.divf %321, %322 : vector<2x128xf32>
    %324 = arith.select %5, %318, %323 : vector<2x128xi1>, vector<2x128xf32>
    %325 = vector.extract_strided_slice %324 {offsets = [0, 0], sizes = [2, 32], strides = [1, 1]} : vector<2x128xf32> to vector<2x32xf32>
    %326 = vector.extract_strided_slice %324 {offsets = [0, 32], sizes = [2, 32], strides = [1, 1]} : vector<2x128xf32> to vector<2x32xf32>
    %327 = vector.extract_strided_slice %324 {offsets = [0, 64], sizes = [2, 32], strides = [1, 1]} : vector<2x128xf32> to vector<2x32xf32>
    %328 = vector.extract_strided_slice %324 {offsets = [0, 96], sizes = [2, 32], strides = [1, 1]} : vector<2x128xf32> to vector<2x32xf32>
    %329 = arith.mulf %326, %311 : vector<2x32xf32>
    %330 = arith.mulf %325, %327 : vector<2x32xf32>
    %331 = arith.addf %329, %330 : vector<2x32xf32>
    %332 = math.tanh %331 : vector<2x32xf32>
    %333 = arith.mulf %328, %332 : vector<2x32xf32>
    %334 = vector.extract_strided_slice %191 {offsets = [14, 0], sizes = [2, 128], strides = [1, 1]} : vector<16x128xf32> to vector<2x128xf32>
    %335 = arith.truncf %333 : vector<2x32xf32> to vector<2x32xbf16>
    %cst_59 = arith.constant dense<0.000000e+00> : vector<2x128xf32>
    %336 = tpu.matmul %335, %185, %cst_59 {dimension_numbers = #tpu.dot_dimension_numbers<[1], [0], [0], [1], [0, 0, 1, 1], [], []>} : vector<2x32xbf16>, vector<32x128xbf16>, vector<2x128xf32> -> vector<2x128xf32>
    %337 = arith.addf %334, %336 : vector<2x128xf32>
    %338 = math.tanh %337 : vector<2x128xf32>
    %339 = arith.negf %337 : vector<2x128xf32>
    %340 = math.exp %339 : vector<2x128xf32>
    %cst_60 = arith.constant 1.000000e+00 : f32
    %341 = vector.broadcast %cst_60 : f32 to vector<2x128xf32>
    %342 = arith.addf %341, %340 : vector<2x128xf32>
    %343 = arith.divf %341, %342 : vector<2x128xf32>
    %344 = arith.select %5, %338, %343 : vector<2x128xi1>, vector<2x128xf32>
    %345 = vector.extract_strided_slice %344 {offsets = [0, 0], sizes = [2, 32], strides = [1, 1]} : vector<2x128xf32> to vector<2x32xf32>
    %346 = vector.extract_strided_slice %344 {offsets = [0, 32], sizes = [2, 32], strides = [1, 1]} : vector<2x128xf32> to vector<2x32xf32>
    %347 = vector.extract_strided_slice %344 {offsets = [0, 64], sizes = [2, 32], strides = [1, 1]} : vector<2x128xf32> to vector<2x32xf32>
    %348 = vector.extract_strided_slice %344 {offsets = [0, 96], sizes = [2, 32], strides = [1, 1]} : vector<2x128xf32> to vector<2x32xf32>
    %349 = arith.mulf %346, %331 : vector<2x32xf32>
    %350 = arith.mulf %345, %347 : vector<2x32xf32>
    %351 = arith.addf %349, %350 : vector<2x32xf32>
    %352 = math.tanh %351 : vector<2x32xf32>
    %353 = arith.mulf %348, %352 : vector<2x32xf32>
    %c0_61 = arith.constant 0 : index
    %c0_62 = arith.constant 0 : index
    %354 = vector.load %arg7[%c0_61, %c0_62] : memref<1x32xf32, #tpu.memory_space<vmem>>, vector<1x32xf32>
    %355 = vector.broadcast %354 : vector<1x32xf32> to vector<2x32xf32>
    %356 = arith.mulf %353, %355 : vector<2x32xf32>
    %cst_63 = arith.constant dense<0.000000e+00> : vector<2xf32>
    %357 = vector.multi_reduction <add>, %356, %cst_63 [1] : vector<2x32xf32> to vector<2xf32>
    %358 = vector.shape_cast %357 : vector<2xf32> to vector<2x1xf32>
    %c0_64 = arith.constant 0 : index
    %c0_65 = arith.constant 0 : index
    %359 = vector.load %arg8[%c0_64, %c0_65] : memref<1x1xf32, #tpu.memory_space<vmem>>, vector<1x1xf32>
    %360 = vector.broadcast %359 : vector<1x1xf32> to vector<2x1xf32>
    %361 = arith.addf %358, %360 : vector<2x1xf32>
    %c0_66 = arith.constant 0 : index
    %c0_67 = arith.constant 0 : index
    %362 = vector.load %arg9[%c0_66, %c0_67] : memref<2x1xf32, #tpu.memory_space<vmem>>, vector<2x1xf32>
    tpu.vector_store %arg9[%c0_66, %c0_67], %361 {strides = array<i32>} : memref<2x1xf32, #tpu.memory_space<vmem>>, vector<2x1xf32>,
    return
  }
}

</mosaic_0001>

<llo_original>
// kernel: bitcoin_lstm_forward.1
$region0: #{bitcoin_lstm_forward.1}
  #allocation0 [shape = 'u32[]', space=smem, size = 0x4, offset = 0x4, fixed_abs, tag = 'smem constant byte address 0x4 - core index']
  #allocation1 [shape = 'u32[144,128]{1,0:T(1,128)}', space=vmem, size = 0x12000, scoped, tag = 'internal scratch']
  #allocation2 [shape = 'f32[16,32]{1,0:T(8,128)}', space=vmem, size = 0x2000, scoped, tag = 'scratch operand']
  #allocation3 [shape = 'f32[1,1]{1,0:T(1,128)S(1)}', space=vmem, size = 0x200, scoped, tag = 'scoped memory for bitcoin_lstm_forward.1']
  %s0 = inlined_call_operand.vmem [shape: f32[16,4], index: 0, kind: input, shape index: {}]
  %s1 = inlined_call_operand.vmem [shape: bf16[4,128], index: 1, kind: input, shape index: {}]
  %s2 = inlined_call_operand.vmem [shape: bf16[32,128], index: 2, kind: input, shape index: {}]
  %s3 = inlined_call_operand.vmem [shape: f32[1,128], index: 3, kind: input, shape index: {}]
  %s4 = inlined_call_operand.vmem [shape: bf16[32,128], index: 4, kind: input, shape index: {}]
  %s5 = inlined_call_operand.vmem [shape: bf16[32,128], index: 5, kind: input, shape index: {}]
  %s6 = inlined_call_operand.vmem [shape: f32[1,128], index: 6, kind: input, shape index: {}]
  %s7 = inlined_call_operand.vmem [shape: f32[1,32], index: 7, kind: input, shape index: {}]
  %s8 = inlined_call_operand.<no memory space> [shape: f32[1,1], index: 8, kind: input, shape index: {}]
  %s9 = inlined_call_operand.vmem [shape: f32[2,1], index: 9, kind: output, shape index: {}]
  %s10 = sld [smem:[#allocation0]]
  $region46: #{bitcoin_lstm_forward.1} parent=0
    _
  %s12 = ssub.s32 1, %s10
  %s13 = scalar_select 0, %s12, %s10
  %v14 = vstv %s8
  %15 = vst [vmem:[#allocation3] sm:$0x1] %v14
  // Predicated region
  $region2: #{bitcoin_lstm_forward.1} parent=0 // pred_check
    _
  $region3: #{bitcoin_lstm_forward.1} parent=0 // pred_check_branch
    %17 = sbr.rel (0) target = $region5
  $region4: #{bitcoin_lstm_forward.1} parent=0 // pred_region
    _
  $region5: #{bitcoin_lstm_forward.1} parent=0 // pred_fallthru
    _
  // Predicated region
  $region6: #{bitcoin_lstm_forward.1} parent=0 // pred_check
    _
  $region7: #{bitcoin_lstm_forward.1} parent=0 // pred_check_branch
    %19 = sbr.rel (0) target = $region9
  $region8: #{bitcoin_lstm_forward.1} parent=0 // pred_region
    _
  $region9: #{bitcoin_lstm_forward.1} parent=0 // pred_fallthru
    _
  // Predicated region
  $region10: #{bitcoin_lstm_forward.1} parent=0 // pred_check
    _
  $region11: #{bitcoin_lstm_forward.1} parent=0 // pred_check_branch
    %21 = sbr.rel (0) target = $region13
  $region12: #{bitcoin_lstm_forward.1} parent=0 // pred_region
    _
  $region13: #{bitcoin_lstm_forward.1} parent=0 // pred_fallthru
    _
  // Predicated region
  $region14: #{bitcoin_lstm_forward.1} parent=0 // pred_check
    _
  $region15: #{bitcoin_lstm_forward.1} parent=0 // pred_check_branch
    %23 = sbr.rel (0) target = $region17
  $region16: #{bitcoin_lstm_forward.1} parent=0 // pred_region
    _
  $region17: #{bitcoin_lstm_forward.1} parent=0 // pred_fallthru
    _
  // Predicated region
  $region18: #{bitcoin_lstm_forward.1} parent=0 // pred_check
    _
  $region19: #{bitcoin_lstm_forward.1} parent=0 // pred_check_branch
    %25 = sbr.rel (0) target = $region21
  $region20: #{bitcoin_lstm_forward.1} parent=0 // pred_region
    _
  $region21: #{bitcoin_lstm_forward.1} parent=0 // pred_fallthru
    _
  // Predicated region
  $region22: #{bitcoin_lstm_forward.1} parent=0 // pred_check
    _
  $region23: #{bitcoin_lstm_forward.1} parent=0 // pred_check_branch
    %27 = sbr.rel (0) target = $region25
  $region24: #{bitcoin_lstm_forward.1} parent=0 // pred_region
    _
  $region25: #{bitcoin_lstm_forward.1} parent=0 // pred_fallthru
    _
  // Predicated region
  $region26: #{bitcoin_lstm_forward.1} parent=0 // pred_check
    _
  $region27: #{bitcoin_lstm_forward.1} parent=0 // pred_check_branch
    %29 = sbr.rel (0) target = $region29
  $region28: #{bitcoin_lstm_forward.1} parent=0 // pred_region
    _
  $region29: #{bitcoin_lstm_forward.1} parent=0 // pred_fallthru
    _
  // Predicated region
  $region30: #{bitcoin_lstm_forward.1} parent=0 // pred_check
    _
  $region31: #{bitcoin_lstm_forward.1} parent=0 // pred_check_branch
    %31 = sbr.rel (0) target = $region33
  $region32: #{bitcoin_lstm_forward.1} parent=0 // pred_region
    _
  $region33: #{bitcoin_lstm_forward.1} parent=0 // pred_fallthru
    _
  // Predicated region
  $region34: #{bitcoin_lstm_forward.1} parent=0 // pred_check
    _
  $region35: #{bitcoin_lstm_forward.1} parent=0 // pred_check_branch
    %33 = sbr.rel (0) target = $region37
  $region36: #{bitcoin_lstm_forward.1} parent=0 // pred_region
    _
  $region37: #{bitcoin_lstm_forward.1} parent=0 // pred_fallthru
    _
  %v35 = vlaneseq
  %v36 = vand.u32 %v35, 127
  %vm37 = vcmp.ge.s32.totalorder %v36, 64
  %vm38 = vcmp.lt.s32.totalorder %v36, 96
  %vm39 = vmand %vm37, %vm38
  %v40 = vld [vmem:[%s1] sm:$0x3]
  %v41 = vld [vmem:[%s2] sm:$0xf]
  %v42 = vld [vmem:[%s2 + $0x4] sm:$0xf]
  %v43 = vld [vmem:[%s2 + $0x8] sm:$0xf]
  %v44 = vld [vmem:[%s2 + $0xc] sm:$0xf]
  %v45 = vld [vmem:[%s0] sm:$0xff]
  %v46 = vld [vmem:[%s0 + $0x8] sm:$0xff]
  %v47 = vpack.c.bf16 %v46, %v45
  %v48 = vld [vmem:[%s3] sm:$0x1]
  %v50 = vlaneseq
  %v51 = vshrl.u32 %v50, 7
  %v52 = vsub.s32 0, %v51
  %v53 = vrot.slane %v48, %v52
  %vm55 = vcmask 31744
  %v57 = vsel %vm55, %v47, 0
  %vm59 = vcmask 1041408
  %v61 = vsel %vm59, %v40, 0
  %63 = vmatprep.subr.bf16.mxu0 0
  %64 = vmatpush1.bf16.msra.mxu0 %v61
  %65 = vmatprep.subr.bf16.mxu0 0
  %66 = vmatpush1.bf16.msra.mxu0 0
  %67 = vmatprep.subr.bf16.mxu0 0
  %68 = vmatpush1.bf16.msra.mxu0 0
  %69 = vmatprep.subr.bf16.mxu0 0
  %70 = vmatpush1.bf16.msra.mxu0 0
  %71 = vmatprep.subr.bf16.mxu0 0
  %72 = vmatpush1.bf16.msra.mxu0 0
  %73 = vmatprep.subr.bf16.mxu0 0
  %74 = vmatpush1.bf16.msra.mxu0 0
  %75 = vmatprep.subr.bf16.mxu0 0
  %76 = vmatpush1.bf16.msra.mxu0 0
  %77 = vmatprep.subr.bf16.mxu0 0
  %78 = vmatpush1.bf16.msra.mxu0 0
  %79 = vmatprep.subr.bf16.mxu0 0
  %80 = vmatpush1.bf16.msra.mxu0 0
  %81 = vmatprep.subr.bf16.mxu0 0
  %82 = vmatpush1.bf16.msra.mxu0 0
  %83 = vmatprep.subr.bf16.mxu0 0
  %84 = vmatpush1.bf16.msra.mxu0 0
  %85 = vmatprep.subr.bf16.mxu0 0
  %86 = vmatpush1.bf16.msra.mxu0 0
  %87 = vmatprep.subr.bf16.mxu0 0
  %88 = vmatpush1.bf16.msra.mxu0 0
  %89 = vmatprep.subr.bf16.mxu0 0
  %90 = vmatpush1.bf16.msra.mxu0 0
  %91 = vmatprep.subr.bf16.mxu0 0
  %92 = vmatpush1.bf16.msra.mxu0 0
  %93 = vmatprep.subr.bf16.mxu0 0
  %94 = vmatpush1.bf16.msra.mxu0 0
  %95 = vmatprep.mubr.bf16.mxu0 0
  %96 = vmatmul.mubr.bf16.gmra.mrb[0].mxu0 %v57
  %v97 = vpop.f32.mrb[0].mxu0
  %v98 = vadd.f32 %v53, %v97
  %v99 = vpop.f32.mrb[0].mxu0
  %v100 = vpop.f32.mrb[0].mxu0
  %v101 = vadd.f32 %v53, %v100
  %v102 = vpop.f32.mrb[0].mxu0
  %103 = vdwg.mxu0
  %v108 = vunpack.c.l.b16 %v41
  %v109 = vunpack.c.l.b16 %v42
  %v110 = vunpack.c.l.b16 %v43
  %v111 = vunpack.c.l.b16 %v44
  %v112 = vpack.c.b16 %v109, %v108
  %v113 = vpack.c.b16 %v111, %v110
  %vm116 = vcmask 261120
  %v118 = vsel %vm116, 0, 0
  %120 = vmatprep.subr.bf16.mxu0 0
  %121 = vmatpush1.bf16.msra.mxu0 %v112
  %122 = vmatprep.subr.bf16.mxu0 0
  %123 = vmatpush1.bf16.msra.mxu0 %v113
  %124 = vmatprep.subr.bf16.mxu0 0
  %125 = vmatpush1.bf16.msra.mxu0 0
  %126 = vmatprep.subr.bf16.mxu0 0
  %127 = vmatpush1.bf16.msra.mxu0 0
  %128 = vmatprep.subr.bf16.mxu0 0
  %129 = vmatpush1.bf16.msra.mxu0 0
  %130 = vmatprep.subr.bf16.mxu0 0
  %131 = vmatpush1.bf16.msra.mxu0 0
  %132 = vmatprep.subr.bf16.mxu0 0
  %133 = vmatpush1.bf16.msra.mxu0 0
  %134 = vmatprep.subr.bf16.mxu0 0
  %135 = vmatpush1.bf16.msra.mxu0 0
  %136 = vmatprep.subr.bf16.mxu0 0
  %137 = vmatpush1.bf16.msra.mxu0 0
  %138 = vmatprep.subr.bf16.mxu0 0
  %139 = vmatpush1.bf16.msra.mxu0 0
  %140 = vmatprep.subr.bf16.mxu0 0
  %141 = vmatpush1.bf16.msra.mxu0 0
  %142 = vmatprep.subr.bf16.mxu0 0
  %143 = vmatpush1.bf16.msra.mxu0 0
  %144 = vmatprep.subr.bf16.mxu0 0
  %145 = vmatpush1.bf16.msra.mxu0 0
  %146 = vmatprep.subr.bf16.mxu0 0
  %147 = vmatpush1.bf16.msra.mxu0 0
  %148 = vmatprep.subr.bf16.mxu0 0
  %149 = vmatpush1.bf16.msra.mxu0 0
  %150 = vmatprep.subr.bf16.mxu0 0
  %151 = vmatpush1.bf16.msra.mxu0 0
  %152 = vmatprep.mubr.bf16.mxu0 0
  %153 = vmatmul.mubr.bf16.gmra.mrb[0].mxu0 %v118
  %v154 = vpop.f32.mrb[0].mxu0
  %v155 = vadd.f32 0.0, %v154
  %v156 = vpop.f32.mrb[0].mxu0
  %v157 = vpop.f32.mrb[0].mxu0
  %v158 = vpop.f32.mrb[0].mxu0
  %159 = vdwg.mxu0
  %v160 = vadd.f32 %v98, %v155
  %v161 = vtanh.pop %v160
  %v162 = vxor.u32 %v160, 2147483648
  %v163 = vmul.f32 %v162, 1.442695
  %v164 = vpow.pop %v163
  %v165 = vadd.f32 %v164, 1.0
  %v166 = vrcp.pop %v165
  %v167 = vmul.f32 1.0, %v166
  %v168 = vsel %vm39, %v161, %v167
  %v169 = vmul.f32 %v168, 0.0
  %171 = vrot.lane.b32.xlu0 %v168, 64
  %v172 = vpop.permute.xlu0 %171
  %v174 = vmul.f32 %v168, %v172
  %176 = vrot.lane.b32.xlu0 %v174, 32
  %v177 = vpop.permute.xlu0 %176
  %v179 = vadd.f32 %v169, %v177
  %v180 = vtanh.pop %v179
  %182 = vrot.lane.b32.xlu0 %v180, 64
  %v183 = vpop.permute.xlu0 %182
  %v185 = vmul.f32 %v168, %v183
  %187 = vrot.lane.b32.xlu0 %v185, 32
  %v188 = vpop.permute.xlu0 %187
  %vm190 = vcmask 254976
  %191 = vst.msk [vmem:[#allocation2] sm:$0x3] %vm190, %v188
  %v192 = vpack.c.bf16 %v185, %v185
  %194 = vrot.lane.b32.xlu0 %v192, 32
  %v195 = vpop.permute.xlu0 %194
  %v197 = vsel %vm116, %v195, 0
  %199 = vmatprep.subr.bf16.mxu0 0
  %200 = vmatpush1.bf16.msra.mxu0 %v112
  %201 = vmatprep.subr.bf16.mxu0 0
  %202 = vmatpush1.bf16.msra.mxu0 %v113
  %203 = vmatprep.subr.bf16.mxu0 0
  %204 = vmatpush1.bf16.msra.mxu0 0
  %205 = vmatprep.subr.bf16.mxu0 0
  %206 = vmatpush1.bf16.msra.mxu0 0
  %207 = vmatprep.subr.bf16.mxu0 0
  %208 = vmatpush1.bf16.msra.mxu0 0
  %209 = vmatprep.subr.bf16.mxu0 0
  %210 = vmatpush1.bf16.msra.mxu0 0
  %211 = vmatprep.subr.bf16.mxu0 0
  %212 = vmatpush1.bf16.msra.mxu0 0
  %213 = vmatprep.subr.bf16.mxu0 0
  %214 = vmatpush1.bf16.msra.mxu0 0
  %215 = vmatprep.subr.bf16.mxu0 0
  %216 = vmatpush1.bf16.msra.mxu0 0
  %217 = vmatprep.subr.bf16.mxu0 0
  %218 = vmatpush1.bf16.msra.mxu0 0
  %219 = vmatprep.subr.bf16.mxu0 0
  %220 = vmatpush1.bf16.msra.mxu0 0
  %221 = vmatprep.subr.bf16.mxu0 0
  %222 = vmatpush1.bf16.msra.mxu0 0
  %223 = vmatprep.subr.bf16.mxu0 0
  %224 = vmatpush1.bf16.msra.mxu0 0
  %225 = vmatprep.subr.bf16.mxu0 0
  %226 = vmatpush1.bf16.msra.mxu0 0
  %227 = vmatprep.subr.bf16.mxu0 0
  %228 = vmatpush1.bf16.msra.mxu0 0
  %229 = vmatprep.subr.bf16.mxu0 0
  %230 = vmatpush1.bf16.msra.mxu0 0
  %231 = vmatprep.mubr.bf16.mxu0 0
  %232 = vmatmul.mubr.bf16.gmra.mrb[0].mxu0 %v197
  %v233 = vpop.f32.mrb[0].mxu0
  %v234 = vadd.f32 0.0, %v233
  %v235 = vpop.f32.mrb[0].mxu0
  %v236 = vpop.f32.mrb[0].mxu0
  %v237 = vpop.f32.mrb[0].mxu0
  %238 = vdwg.mxu0
  %v240 = vrot.slane %v234, 6
  %v242 = vadd.f32 %v98, %v240
  %v243 = vtanh.pop %v242
  %v244 = vxor.u32 %v242, 2147483648
  %v245 = vmul.f32 %v244, 1.442695
  %v246 = vpow.pop %v245
  %v247 = vadd.f32 %v246, 1.0
  %v248 = vrcp.pop %v247
  %v249 = vmul.f32 1.0, %v248
  %v250 = vsel %vm39, %v243, %v249
  %v252 = vrot.slane %v179, 6
  %v254 = vmul.f32 %v250, %v252
  %256 = vrot.lane.b32.xlu0 %v250, 64
  %v257 = vpop.permute.xlu0 %256
  %v259 = vmul.f32 %v250, %v257
  %261 = vrot.lane.b32.xlu0 %v259, 32
  %v262 = vpop.permute.xlu0 %261
  %v264 = vadd.f32 %v254, %v262
  %v265 = vtanh.pop %v264
  %267 = vrot.lane.b32.xlu0 %v265, 64
  %v268 = vpop.permute.xlu0 %267
  %v270 = vmul.f32 %v250, %v268
  %272 = vrot.lane.b32.xlu0 %v270, 32
  %v273 = vpop.permute.xlu0 %272
  %vm275 = vcmask 257026
  %276 = vst.msk [vmem:[#allocation2] sm:$0xc] %vm275, %v273
  %v277 = vpack.c.bf16 %v270, %v270
  %v279 = vrot.slane %v277, 1
  %280 = vrot.lane.b32.xlu0 %v279, 32
  %v281 = vpop.permute.xlu0 %280
  %v283 = vsel %vm116, %v281, 0
  %285 = vmatprep.subr.bf16.mxu0 0
  %286 = vmatpush1.bf16.msra.mxu0 %v112
  %287 = vmatprep.subr.bf16.mxu0 0
  %288 = vmatpush1.bf16.msra.mxu0 %v113
  %289 = vmatprep.subr.bf16.mxu0 0
  %290 = vmatpush1.bf16.msra.mxu0 0
  %291 = vmatprep.subr.bf16.mxu0 0
  %292 = vmatpush1.bf16.msra.mxu0 0
  %293 = vmatprep.subr.bf16.mxu0 0
  %294 = vmatpush1.bf16.msra.mxu0 0
  %295 = vmatprep.subr.bf16.mxu0 0
  %296 = vmatpush1.bf16.msra.mxu0 0
  %297 = vmatprep.subr.bf16.mxu0 0
  %298 = vmatpush1.bf16.msra.mxu0 0
  %299 = vmatprep.subr.bf16.mxu0 0
  %300 = vmatpush1.bf16.msra.mxu0 0
  %301 = vmatprep.subr.bf16.mxu0 0
  %302 = vmatpush1.bf16.msra.mxu0 0
  %303 = vmatprep.subr.bf16.mxu0 0
  %304 = vmatpush1.bf16.msra.mxu0 0
  %305 = vmatprep.subr.bf16.mxu0 0
  %306 = vmatpush1.bf16.msra.mxu0 0
  %307 = vmatprep.subr.bf16.mxu0 0
  %308 = vmatpush1.bf16.msra.mxu0 0
  %309 = vmatprep.subr.bf16.mxu0 0
  %310 = vmatpush1.bf16.msra.mxu0 0
  %311 = vmatprep.subr.bf16.mxu0 0
  %312 = vmatpush1.bf16.msra.mxu0 0
  %313 = vmatprep.subr.bf16.mxu0 0
  %314 = vmatpush1.bf16.msra.mxu0 0
  %315 = vmatprep.subr.bf16.mxu0 0
  %316 = vmatpush1.bf16.msra.mxu0 0
  %317 = vmatprep.mubr.bf16.mxu0 0
  %318 = vmatmul.mubr.bf16.gmra.mrb[0].mxu0 %v283
  %v319 = vpop.f32.mrb[0].mxu0
  %v320 = vadd.f32 0.0, %v319
  %v321 = vpop.f32.mrb[0].mxu0
  %v322 = vpop.f32.mrb[0].mxu0
  %v323 = vpop.f32.mrb[0].mxu0
  %324 = vdwg.mxu0
  %v326 = vrot.slane %v320, 4
  %v328 = vadd.f32 %v98, %v326
  %v329 = vtanh.pop %v328
  %v330 = vxor.u32 %v328, 2147483648
  %v331 = vmul.f32 %v330, 1.442695
  %v332 = vpow.pop %v331
  %v333 = vadd.f32 %v332, 1.0
  %v334 = vrcp.pop %v333
  %v335 = vmul.f32 1.0, %v334
  %v336 = vsel %vm39, %v329, %v335
  %v338 = vrot.slane %v264, 6
  %v340 = vmul.f32 %v336, %v338
  %342 = vrot.lane.b32.xlu0 %v336, 64
  %v343 = vpop.permute.xlu0 %342
  %v345 = vmul.f32 %v336, %v343
  %347 = vrot.lane.b32.xlu0 %v345, 32
  %v348 = vpop.permute.xlu0 %347
  %v350 = vadd.f32 %v340, %v348
  %v351 = vtanh.pop %v350
  %353 = vrot.lane.b32.xlu0 %v351, 64
  %v354 = vpop.permute.xlu0 %353
  %v356 = vmul.f32 %v336, %v354
  %358 = vrot.lane.b32.xlu0 %v356, 32
  %v359 = vpop.permute.xlu0 %358
  %vm361 = vcmask 259076
  %362 = vst.msk [vmem:[#allocation2] sm:$0x30] %vm361, %v359
  %v363 = vpack.c.bf16 %v356, %v356
  %v365 = vrot.slane %v363, 2
  %366 = vrot.lane.b32.xlu0 %v365, 32
  %v367 = vpop.permute.xlu0 %366
  %v369 = vsel %vm116, %v367, 0
  %371 = vmatprep.subr.bf16.mxu0 0
  %372 = vmatpush1.bf16.msra.mxu0 %v112
  %373 = vmatprep.subr.bf16.mxu0 0
  %374 = vmatpush1.bf16.msra.mxu0 %v113
  %375 = vmatprep.subr.bf16.mxu0 0
  %376 = vmatpush1.bf16.msra.mxu0 0
  %377 = vmatprep.subr.bf16.mxu0 0
  %378 = vmatpush1.bf16.msra.mxu0 0
  %379 = vmatprep.subr.bf16.mxu0 0
  %380 = vmatpush1.bf16.msra.mxu0 0
  %381 = vmatprep.subr.bf16.mxu0 0
  %382 = vmatpush1.bf16.msra.mxu0 0
  %383 = vmatprep.subr.bf16.mxu0 0
  %384 = vmatpush1.bf16.msra.mxu0 0
  %385 = vmatprep.subr.bf16.mxu0 0
  %386 = vmatpush1.bf16.msra.mxu0 0
  %387 = vmatprep.subr.bf16.mxu0 0
  %388 = vmatpush1.bf16.msra.mxu0 0
  %389 = vmatprep.subr.bf16.mxu0 0
  %390 = vmatpush1.bf16.msra.mxu0 0
  %391 = vmatprep.subr.bf16.mxu0 0
  %392 = vmatpush1.bf16.msra.mxu0 0
  %393 = vmatprep.subr.bf16.mxu0 0
  %394 = vmatpush1.bf16.msra.mxu0 0
  %395 = vmatprep.subr.bf16.mxu0 0
  %396 = vmatpush1.bf16.msra.mxu0 0
  %397 = vmatprep.subr.bf16.mxu0 0
  %398 = vmatpush1.bf16.msra.mxu0 0
  %399 = vmatprep.subr.bf16.mxu0 0
  %400 = vmatpush1.bf16.msra.mxu0 0
  %401 = vmatprep.subr.bf16.mxu0 0
  %402 = vmatpush1.bf16.msra.mxu0 0
  %403 = vmatprep.mubr.bf16.mxu0 0
  %404 = vmatmul.mubr.bf16.gmra.mrb[0].mxu0 %v369
  %v405 = vpop.f32.mrb[0].mxu0
  %v406 = vadd.f32 0.0, %v405
  %v407 = vpop.f32.mrb[0].mxu0
  %v408 = vpop.f32.mrb[0].mxu0
  %v409 = vpop.f32.mrb[0].mxu0
  %410 = vdwg.mxu0
  %v412 = vrot.slane %v406, 2
  %v414 = vadd.f32 %v98, %v412
  %v415 = vtanh.pop %v414
  %v416 = vxor.u32 %v414, 2147483648
  %v417 = vmul.f32 %v416, 1.442695
  %v418 = vpow.pop %v417
  %v419 = vadd.f32 %v418, 1.0
  %v420 = vrcp.pop %v419
  %v421 = vmul.f32 1.0, %v420
  %v422 = vsel %vm39, %v415, %v421
  %v424 = vrot.slane %v350, 6
  %v426 = vmul.f32 %v422, %v424
  %428 = vrot.lane.b32.xlu0 %v422, 64
  %v429 = vpop.permute.xlu0 %428
  %v431 = vmul.f32 %v422, %v429
  %433 = vrot.lane.b32.xlu0 %v431, 32
  %v434 = vpop.permute.xlu0 %433
  %v436 = vadd.f32 %v426, %v434
  %v437 = vtanh.pop %v436
  %439 = vrot.lane.b32.xlu0 %v437, 64
  %v440 = vpop.permute.xlu0 %439
  %v442 = vmul.f32 %v422, %v440
  %444 = vrot.lane.b32.xlu0 %v442, 32
  %v445 = vpop.permute.xlu0 %444
  %vm447 = vcmask 261126
  %448 = vst.msk [vmem:[#allocation2] sm:$0xc0] %vm447, %v445
  %v449 = vpack.c.bf16 %v442, %v442
  %v451 = vrot.slane %v449, 3
  %452 = vrot.lane.b32.xlu0 %v451, 32
  %v453 = vpop.permute.xlu0 %452
  %v455 = vsel %vm116, %v453, 0
  %457 = vmatprep.subr.bf16.mxu0 0
  %458 = vmatpush1.bf16.msra.mxu0 %v112
  %459 = vmatprep.subr.bf16.mxu0 0
  %460 = vmatpush1.bf16.msra.mxu0 %v113
  %461 = vmatprep.subr.bf16.mxu0 0
  %462 = vmatpush1.bf16.msra.mxu0 0
  %463 = vmatprep.subr.bf16.mxu0 0
  %464 = vmatpush1.bf16.msra.mxu0 0
  %465 = vmatprep.subr.bf16.mxu0 0
  %466 = vmatpush1.bf16.msra.mxu0 0
  %467 = vmatprep.subr.bf16.mxu0 0
  %468 = vmatpush1.bf16.msra.mxu0 0
  %469 = vmatprep.subr.bf16.mxu0 0
  %470 = vmatpush1.bf16.msra.mxu0 0
  %471 = vmatprep.subr.bf16.mxu0 0
  %472 = vmatpush1.bf16.msra.mxu0 0
  %473 = vmatprep.subr.bf16.mxu0 0
  %474 = vmatpush1.bf16.msra.mxu0 0
  %475 = vmatprep.subr.bf16.mxu0 0
  %476 = vmatpush1.bf16.msra.mxu0 0
  %477 = vmatprep.subr.bf16.mxu0 0
  %478 = vmatpush1.bf16.msra.mxu0 0
  %479 = vmatprep.subr.bf16.mxu0 0
  %480 = vmatpush1.bf16.msra.mxu0 0
  %481 = vmatprep.subr.bf16.mxu0 0
  %482 = vmatpush1.bf16.msra.mxu0 0
  %483 = vmatprep.subr.bf16.mxu0 0
  %484 = vmatpush1.bf16.msra.mxu0 0
  %485 = vmatprep.subr.bf16.mxu0 0
  %486 = vmatpush1.bf16.msra.mxu0 0
  %487 = vmatprep.subr.bf16.mxu0 0
  %488 = vmatpush1.bf16.msra.mxu0 0
  %489 = vmatprep.mubr.bf16.mxu0 0
  %490 = vmatmul.mubr.bf16.gmra.mrb[0].mxu0 %v455
  %v491 = vpop.f32.mrb[0].mxu0
  %v492 = vadd.f32 0.0, %v491
  %v493 = vpop.f32.mrb[0].mxu0
  %v494 = vpop.f32.mrb[0].mxu0
  %v495 = vpop.f32.mrb[0].mxu0
  %496 = vdwg.mxu0
  %v497 = vadd.f32 %v101, %v492
  %v498 = vtanh.pop %v497
  %v499 = vxor.u32 %v497, 2147483648
  %v500 = vmul.f32 %v499, 1.442695
  %v501 = vpow.pop %v500
  %v502 = vadd.f32 %v501, 1.0
  %v503 = vrcp.pop %v502
  %v504 = vmul.f32 1.0, %v503
  %v505 = vsel %vm39, %v498, %v504
  %v507 = vrot.slane %v436, 6
  %v509 = vmul.f32 %v505, %v507
  %511 = vrot.lane.b32.xlu0 %v505, 64
  %v512 = vpop.permute.xlu0 %511
  %v514 = vmul.f32 %v505, %v512
  %516 = vrot.lane.b32.xlu0 %v514, 32
  %v517 = vpop.permute.xlu0 %516
  %v519 = vadd.f32 %v509, %v517
  %v520 = vtanh.pop %v519
  %522 = vrot.lane.b32.xlu0 %v520, 64
  %v523 = vpop.permute.xlu0 %522
  %v525 = vmul.f32 %v505, %v523
  %527 = vrot.lane.b32.xlu0 %v525, 32
  %v528 = vpop.permute.xlu0 %527
  %530 = vst.msk [vmem:[#allocation2 + $0x8] sm:$0x3] %vm190, %v528
  %v531 = vpack.c.bf16 %v525, %v525
  %533 = vrot.lane.b32.xlu0 %v531, 32
  %v534 = vpop.permute.xlu0 %533
  %v536 = vsel %vm116, %v534, 0
  %538 = vmatprep.subr.bf16.mxu0 0
  %539 = vmatpush1.bf16.msra.mxu0 %v112
  %540 = vmatprep.subr.bf16.mxu0 0
  %541 = vmatpush1.bf16.msra.mxu0 %v113
  %542 = vmatprep.subr.bf16.mxu0 0
  %543 = vmatpush1.bf16.msra.mxu0 0
  %544 = vmatprep.subr.bf16.mxu0 0
  %545 = vmatpush1.bf16.msra.mxu0 0
  %546 = vmatprep.subr.bf16.mxu0 0
  %547 = vmatpush1.bf16.msra.mxu0 0
  %548 = vmatprep.subr.bf16.mxu0 0
  %549 = vmatpush1.bf16.msra.mxu0 0
  %550 = vmatprep.subr.bf16.mxu0 0
  %551 = vmatpush1.bf16.msra.mxu0 0
  %552 = vmatprep.subr.bf16.mxu0 0
  %553 = vmatpush1.bf16.msra.mxu0 0
  %554 = vmatprep.subr.bf16.mxu0 0
  %555 = vmatpush1.bf16.msra.mxu0 0
  %556 = vmatprep.subr.bf16.mxu0 0
  %557 = vmatpush1.bf16.msra.mxu0 0
  %558 = vmatprep.subr.bf16.mxu0 0
  %559 = vmatpush1.bf16.msra.mxu0 0
  %560 = vmatprep.subr.bf16.mxu0 0
  %561 = vmatpush1.bf16.msra.mxu0 0
  %562 = vmatprep.subr.bf16.mxu0 0
  %563 = vmatpush1.bf16.msra.mxu0 0
  %564 = vmatprep.subr.bf16.mxu0 0
  %565 = vmatpush1.bf16.msra.mxu0 0
  %566 = vmatprep.subr.bf16.mxu0 0
  %567 = vmatpush1.bf16.msra.mxu0 0
  %568 = vmatprep.subr.bf16.mxu0 0
  %569 = vmatpush1.bf16.msra.mxu0 0
  %570 = vmatprep.mubr.bf16.mxu0 0
  %571 = vmatmul.mubr.bf16.gmra.mrb[0].mxu0 %v536
  %v572 = vpop.f32.mrb[0].mxu0
  %v573 = vadd.f32 0.0, %v572
  %v574 = vpop.f32.mrb[0].mxu0
  %v575 = vpop.f32.mrb[0].mxu0
  %v576 = vpop.f32.mrb[0].mxu0
  %577 = vdwg.mxu0
  %v579 = vrot.slane %v573, 6
  %v581 = vadd.f32 %v101, %v579
  %v582 = vtanh.pop %v581
  %v583 = vxor.u32 %v581, 2147483648
  %v584 = vmul.f32 %v583, 1.442695
  %v585 = vpow.pop %v584
  %v586 = vadd.f32 %v585, 1.0
  %v587 = vrcp.pop %v586
  %v588 = vmul.f32 1.0, %v587
  %v589 = vsel %vm39, %v582, %v588
  %v591 = vrot.slane %v519, 6
  %v593 = vmul.f32 %v589, %v591
  %595 = vrot.lane.b32.xlu0 %v589, 64
  %v596 = vpop.permute.xlu0 %595
  %v598 = vmul.f32 %v589, %v596
  %600 = vrot.lane.b32.xlu0 %v598, 32
  %v601 = vpop.permute.xlu0 %600
  %v603 = vadd.f32 %v593, %v601
  %v604 = vtanh.pop %v603
  %606 = vrot.lane.b32.xlu0 %v604, 64
  %v607 = vpop.permute.xlu0 %606
  %v609 = vmul.f32 %v589, %v607
  %611 = vrot.lane.b32.xlu0 %v609, 32
  %v612 = vpop.permute.xlu0 %611
  %614 = vst.msk [vmem:[#allocation2 + $0x8] sm:$0xc] %vm275, %v612
  %v615 = vpack.c.bf16 %v609, %v609
  %v617 = vrot.slane %v615, 1
  %618 = vrot.lane.b32.xlu0 %v617, 32
  %v619 = vpop.permute.xlu0 %618
  %v621 = vsel %vm116, %v619, 0
  %623 = vmatprep.subr.bf16.mxu0 0
  %624 = vmatpush1.bf16.msra.mxu0 %v112
  %625 = vmatprep.subr.bf16.mxu0 0
  %626 = vmatpush1.bf16.msra.mxu0 %v113
  %627 = vmatprep.subr.bf16.mxu0 0
  %628 = vmatpush1.bf16.msra.mxu0 0
  %629 = vmatprep.subr.bf16.mxu0 0
  %630 = vmatpush1.bf16.msra.mxu0 0
  %631 = vmatprep.subr.bf16.mxu0 0
  %632 = vmatpush1.bf16.msra.mxu0 0
  %633 = vmatprep.subr.bf16.mxu0 0
  %634 = vmatpush1.bf16.msra.mxu0 0
  %635 = vmatprep.subr.bf16.mxu0 0
  %636 = vmatpush1.bf16.msra.mxu0 0
  %637 = vmatprep.subr.bf16.mxu0 0
  %638 = vmatpush1.bf16.msra.mxu0 0
  %639 = vmatprep.subr.bf16.mxu0 0
  %640 = vmatpush1.bf16.msra.mxu0 0
  %641 = vmatprep.subr.bf16.mxu0 0
  %642 = vmatpush1.bf16.msra.mxu0 0
  %643 = vmatprep.subr.bf16.mxu0 0
  %644 = vmatpush1.bf16.msra.mxu0 0
  %645 = vmatprep.subr.bf16.mxu0 0
  %646 = vmatpush1.bf16.msra.mxu0 0
  %647 = vmatprep.subr.bf16.mxu0 0
  %648 = vmatpush1.bf16.msra.mxu0 0
  %649 = vmatprep.subr.bf16.mxu0 0
  %650 = vmatpush1.bf16.msra.mxu0 0
  %651 = vmatprep.subr.bf16.mxu0 0
  %652 = vmatpush1.bf16.msra.mxu0 0
  %653 = vmatprep.subr.bf16.mxu0 0
  %654 = vmatpush1.bf16.msra.mxu0 0
  %655 = vmatprep.mubr.bf16.mxu0 0
  %656 = vmatmul.mubr.bf16.gmra.mrb[0].mxu0 %v621
  %v657 = vpop.f32.mrb[0].mxu0
  %v658 = vadd.f32 0.0, %v657
  %v659 = vpop.f32.mrb[0].mxu0
  %v660 = vpop.f32.mrb[0].mxu0
  %v661 = vpop.f32.mrb[0].mxu0
  %662 = vdwg.mxu0
  %v664 = vrot.slane %v658, 4
  %v666 = vadd.f32 %v101, %v664
  %v667 = vtanh.pop %v666
  %v668 = vxor.u32 %v666, 2147483648
  %v669 = vmul.f32 %v668, 1.442695
  %v670 = vpow.pop %v669
  %v671 = vadd.f32 %v670, 1.0
  %v672 = vrcp.pop %v671
  %v673 = vmul.f32 1.0, %v672
  %v674 = vsel %vm39, %v667, %v673
  %v676 = vrot.slane %v603, 6
  %v678 = vmul.f32 %v674, %v676
  %680 = vrot.lane.b32.xlu0 %v674, 64
  %v681 = vpop.permute.xlu0 %680
  %v683 = vmul.f32 %v674, %v681
  %685 = vrot.lane.b32.xlu0 %v683, 32
  %v686 = vpop.permute.xlu0 %685
  %v688 = vadd.f32 %v678, %v686
  %v689 = vtanh.pop %v688
  %691 = vrot.lane.b32.xlu0 %v689, 64
  %v692 = vpop.permute.xlu0 %691
  %v694 = vmul.f32 %v674, %v692
  %696 = vrot.lane.b32.xlu0 %v694, 32
  %v697 = vpop.permute.xlu0 %696
  %699 = vst.msk [vmem:[#allocation2 + $0x8] sm:$0x30] %vm361, %v697
  %v700 = vpack.c.bf16 %v694, %v694
  %v702 = vrot.slane %v700, 2
  %703 = vrot.lane.b32.xlu0 %v702, 32
  %v704 = vpop.permute.xlu0 %703
  %v706 = vsel %vm116, %v704, 0
  %708 = vmatprep.subr.bf16.mxu0 0
  %709 = vmatpush1.bf16.msra.mxu0 %v112
  %710 = vmatprep.subr.bf16.mxu0 0
  %711 = vmatpush1.bf16.msra.mxu0 %v113
  %712 = vmatprep.subr.bf16.mxu0 0
  %713 = vmatpush1.bf16.msra.mxu0 0
  %714 = vmatprep.subr.bf16.mxu0 0
  %715 = vmatpush1.bf16.msra.mxu0 0
  %716 = vmatprep.subr.bf16.mxu0 0
  %717 = vmatpush1.bf16.msra.mxu0 0
  %718 = vmatprep.subr.bf16.mxu0 0
  %719 = vmatpush1.bf16.msra.mxu0 0
  %720 = vmatprep.subr.bf16.mxu0 0
  %721 = vmatpush1.bf16.msra.mxu0 0
  %722 = vmatprep.subr.bf16.mxu0 0
  %723 = vmatpush1.bf16.msra.mxu0 0
  %724 = vmatprep.subr.bf16.mxu0 0
  %725 = vmatpush1.bf16.msra.mxu0 0
  %726 = vmatprep.subr.bf16.mxu0 0
  %727 = vmatpush1.bf16.msra.mxu0 0
  %728 = vmatprep.subr.bf16.mxu0 0
  %729 = vmatpush1.bf16.msra.mxu0 0
  %730 = vmatprep.subr.bf16.mxu0 0
  %731 = vmatpush1.bf16.msra.mxu0 0
  %732 = vmatprep.subr.bf16.mxu0 0
  %733 = vmatpush1.bf16.msra.mxu0 0
  %734 = vmatprep.subr.bf16.mxu0 0
  %735 = vmatpush1.bf16.msra.mxu0 0
  %736 = vmatprep.subr.bf16.mxu0 0
  %737 = vmatpush1.bf16.msra.mxu0 0
  %738 = vmatprep.subr.bf16.mxu0 0
  %739 = vmatpush1.bf16.msra.mxu0 0
  %740 = vmatprep.mubr.bf16.mxu0 0
  %741 = vmatmul.mubr.bf16.gmra.mrb[0].mxu0 %v706
  %v742 = vpop.f32.mrb[0].mxu0
  %v743 = vadd.f32 0.0, %v742
  %v744 = vpop.f32.mrb[0].mxu0
  %v745 = vpop.f32.mrb[0].mxu0
  %v746 = vpop.f32.mrb[0].mxu0
  %747 = vdwg.mxu0
  %v749 = vrot.slane %v743, 2
  %v751 = vadd.f32 %v101, %v749
  %v752 = vtanh.pop %v751
  %v753 = vxor.u32 %v751, 2147483648
  %v754 = vmul.f32 %v753, 1.442695
  %v755 = vpow.pop %v754
  %v756 = vadd.f32 %v755, 1.0
  %v757 = vrcp.pop %v756
  %v758 = vmul.f32 1.0, %v757
  %v759 = vsel %vm39, %v752, %v758
  %v761 = vrot.slane %v688, 6
  %v763 = vmul.f32 %v759, %v761
  %765 = vrot.lane.b32.xlu0 %v759, 64
  %v766 = vpop.permute.xlu0 %765
  %v768 = vmul.f32 %v759, %v766
  %770 = vrot.lane.b32.xlu0 %v768, 32
  %v771 = vpop.permute.xlu0 %770
  %v773 = vadd.f32 %v763, %v771
  %v774 = vtanh.pop %v773
  %776 = vrot.lane.b32.xlu0 %v774, 64
  %v777 = vpop.permute.xlu0 %776
  %v779 = vmul.f32 %v759, %v777
  %781 = vrot.lane.b32.xlu0 %v779, 32
  %v782 = vpop.permute.xlu0 %781
  %784 = vst.msk [vmem:[#allocation2 + $0x8] sm:$0xc0] %vm447, %v782
  %v785 = vld [vmem:[%s4] sm:$0xf]
  %v786 = vld [vmem:[%s4 + $0x4] sm:$0xf]
  %v787 = vld [vmem:[%s4 + $0x8] sm:$0xf]
  %v788 = vld [vmem:[%s4 + $0xc] sm:$0xf]
  %v789 = vld [vmem:[%s5] sm:$0xf]
  %v790 = vld [vmem:[%s5 + $0x4] sm:$0xf]
  %v791 = vld [vmem:[%s5 + $0x8] sm:$0xf]
  %v792 = vld [vmem:[%s5 + $0xc] sm:$0xf]
  %v793 = vld [vmem:[#allocation2] sm:$0xff]
  %v794 = vld [vmem:[#allocation2 + $0x8] sm:$0xff]
  %v795 = vpack.c.bf16 %v794, %v793
  %v796 = vld [vmem:[%s6] sm:$0x1]
  %v798 = vlaneseq
  %v799 = vshrl.u32 %v798, 7
  %v800 = vsub.s32 0, %v799
  %v801 = vrot.slane %v796, %v800
  %v807 = vunpack.c.l.b16 %v785
  %v808 = vunpack.c.l.b16 %v786
  %v809 = vunpack.c.l.b16 %v787
  %v810 = vunpack.c.l.b16 %v788
  %v811 = vpack.c.b16 %v808, %v807
  %v812 = vpack.c.b16 %v810, %v809
  %v816 = vsel %vm116, %v795, 0
  %818 = vmatprep.subr.bf16.mxu0 0
  %819 = vmatpush1.bf16.msra.mxu0 %v811
  %820 = vmatprep.subr.bf16.mxu0 0
  %821 = vmatpush1.bf16.msra.mxu0 %v812
  %822 = vmatprep.subr.bf16.mxu0 0
  %823 = vmatpush1.bf16.msra.mxu0 0
  %824 = vmatprep.subr.bf16.mxu0 0
  %825 = vmatpush1.bf16.msra.mxu0 0
  %826 = vmatprep.subr.bf16.mxu0 0
  %827 = vmatpush1.bf16.msra.mxu0 0
  %828 = vmatprep.subr.bf16.mxu0 0
  %829 = vmatpush1.bf16.msra.mxu0 0
  %830 = vmatprep.subr.bf16.mxu0 0
  %831 = vmatpush1.bf16.msra.mxu0 0
  %832 = vmatprep.subr.bf16.mxu0 0
  %833 = vmatpush1.bf16.msra.mxu0 0
  %834 = vmatprep.subr.bf16.mxu0 0
  %835 = vmatpush1.bf16.msra.mxu0 0
  %836 = vmatprep.subr.bf16.mxu0 0
  %837 = vmatpush1.bf16.msra.mxu0 0
  %838 = vmatprep.subr.bf16.mxu0 0
  %839 = vmatpush1.bf16.msra.mxu0 0
  %840 = vmatprep.subr.bf16.mxu0 0
  %841 = vmatpush1.bf16.msra.mxu0 0
  %842 = vmatprep.subr.bf16.mxu0 0
  %843 = vmatpush1.bf16.msra.mxu0 0
  %844 = vmatprep.subr.bf16.mxu0 0
  %845 = vmatpush1.bf16.msra.mxu0 0
  %846 = vmatprep.subr.bf16.mxu0 0
  %847 = vmatpush1.bf16.msra.mxu0 0
  %848 = vmatprep.subr.bf16.mxu0 0
  %849 = vmatpush1.bf16.msra.mxu0 0
  %850 = vmatprep.mubr.bf16.mxu0 0
  %851 = vmatmul.mubr.bf16.gmra.mrb[0].mxu0 %v816
  %v852 = vpop.f32.mrb[0].mxu0
  %v853 = vadd.f32 %v801, %v852
  %v854 = vpop.f32.mrb[0].mxu0
  %v855 = vpop.f32.mrb[0].mxu0
  %v856 = vadd.f32 %v801, %v855
  %v857 = vpop.f32.mrb[0].mxu0
  %858 = vdwg.mxu0
  %v863 = vunpack.c.l.b16 %v789
  %v864 = vunpack.c.l.b16 %v790
  %v865 = vunpack.c.l.b16 %v791
  %v866 = vunpack.c.l.b16 %v792
  %v867 = vpack.c.b16 %v864, %v863
  %v868 = vpack.c.b16 %v866, %v865
  %871 = vmatprep.subr.bf16.mxu0 0
  %872 = vmatpush1.bf16.msra.mxu0 %v867
  %873 = vmatprep.subr.bf16.mxu0 0
  %874 = vmatpush1.bf16.msra.mxu0 %v868
  %875 = vmatprep.subr.bf16.mxu0 0
  %876 = vmatpush1.bf16.msra.mxu0 0
  %877 = vmatprep.subr.bf16.mxu0 0
  %878 = vmatpush1.bf16.msra.mxu0 0
  %879 = vmatprep.subr.bf16.mxu0 0
  %880 = vmatpush1.bf16.msra.mxu0 0
  %881 = vmatprep.subr.bf16.mxu0 0
  %882 = vmatpush1.bf16.msra.mxu0 0
  %883 = vmatprep.subr.bf16.mxu0 0
  %884 = vmatpush1.bf16.msra.mxu0 0
  %885 = vmatprep.subr.bf16.mxu0 0
  %886 = vmatpush1.bf16.msra.mxu0 0
  %887 = vmatprep.subr.bf16.mxu0 0
  %888 = vmatpush1.bf16.msra.mxu0 0
  %889 = vmatprep.subr.bf16.mxu0 0
  %890 = vmatpush1.bf16.msra.mxu0 0
  %891 = vmatprep.subr.bf16.mxu0 0
  %892 = vmatpush1.bf16.msra.mxu0 0
  %893 = vmatprep.subr.bf16.mxu0 0
  %894 = vmatpush1.bf16.msra.mxu0 0
  %895 = vmatprep.subr.bf16.mxu0 0
  %896 = vmatpush1.bf16.msra.mxu0 0
  %897 = vmatprep.subr.bf16.mxu0 0
  %898 = vmatpush1.bf16.msra.mxu0 0
  %899 = vmatprep.subr.bf16.mxu0 0
  %900 = vmatpush1.bf16.msra.mxu0 0
  %901 = vmatprep.subr.bf16.mxu0 0
  %902 = vmatpush1.bf16.msra.mxu0 0
  %903 = vmatprep.mubr.bf16.mxu0 0
  %904 = vmatmul.mubr.bf16.gmra.mrb[0].mxu0 %v118
  %v905 = vpop.f32.mrb[0].mxu0
  %v906 = vadd.f32 0.0, %v905
  %v907 = vpop.f32.mrb[0].mxu0
  %v908 = vpop.f32.mrb[0].mxu0
  %v909 = vpop.f32.mrb[0].mxu0
  %910 = vdwg.mxu0
  %v911 = vadd.f32 %v853, %v906
  %v912 = vtanh.pop %v911
  %v913 = vxor.u32 %v911, 2147483648
  %v914 = vmul.f32 %v913, 1.442695
  %v915 = vpow.pop %v914
  %v916 = vadd.f32 %v915, 1.0
  %v917 = vrcp.pop %v916
  %v918 = vmul.f32 1.0, %v917
  %v919 = vsel %vm39, %v912, %v918
  %v920 = vmul.f32 %v919, 0.0
  %922 = vrot.lane.b32.xlu0 %v919, 64
  %v923 = vpop.permute.xlu0 %922
  %v925 = vmul.f32 %v919, %v923
  %927 = vrot.lane.b32.xlu0 %v925, 32
  %v928 = vpop.permute.xlu0 %927
  %v930 = vadd.f32 %v920, %v928
  %v931 = vtanh.pop %v930
  %933 = vrot.lane.b32.xlu0 %v931, 64
  %v934 = vpop.permute.xlu0 %933
  %v936 = vmul.f32 %v919, %v934
  %v937 = vpack.c.bf16 %v936, %v936
  %939 = vrot.lane.b32.xlu0 %v937, 32
  %v940 = vpop.permute.xlu0 %939
  %v942 = vsel %vm116, %v940, 0
  %944 = vmatprep.subr.bf16.mxu0 0
  %945 = vmatpush1.bf16.msra.mxu0 %v867
  %946 = vmatprep.subr.bf16.mxu0 0
  %947 = vmatpush1.bf16.msra.mxu0 %v868
  %948 = vmatprep.subr.bf16.mxu0 0
  %949 = vmatpush1.bf16.msra.mxu0 0
  %950 = vmatprep.subr.bf16.mxu0 0
  %951 = vmatpush1.bf16.msra.mxu0 0
  %952 = vmatprep.subr.bf16.mxu0 0
  %953 = vmatpush1.bf16.msra.mxu0 0
  %954 = vmatprep.subr.bf16.mxu0 0
  %955 = vmatpush1.bf16.msra.mxu0 0
  %956 = vmatprep.subr.bf16.mxu0 0
  %957 = vmatpush1.bf16.msra.mxu0 0
  %958 = vmatprep.subr.bf16.mxu0 0
  %959 = vmatpush1.bf16.msra.mxu0 0
  %960 = vmatprep.subr.bf16.mxu0 0
  %961 = vmatpush1.bf16.msra.mxu0 0
  %962 = vmatprep.subr.bf16.mxu0 0
  %963 = vmatpush1.bf16.msra.mxu0 0
  %964 = vmatprep.subr.bf16.mxu0 0
  %965 = vmatpush1.bf16.msra.mxu0 0
  %966 = vmatprep.subr.bf16.mxu0 0
  %967 = vmatpush1.bf16.msra.mxu0 0
  %968 = vmatprep.subr.bf16.mxu0 0
  %969 = vmatpush1.bf16.msra.mxu0 0
  %970 = vmatprep.subr.bf16.mxu0 0
  %971 = vmatpush1.bf16.msra.mxu0 0
  %972 = vmatprep.subr.bf16.mxu0 0
  %973 = vmatpush1.bf16.msra.mxu0 0
  %974 = vmatprep.subr.bf16.mxu0 0
  %975 = vmatpush1.bf16.msra.mxu0 0
  %976 = vmatprep.mubr.bf16.mxu0 0
  %977 = vmatmul.mubr.bf16.gmra.mrb[0].mxu0 %v942
  %v978 = vpop.f32.mrb[0].mxu0
  %v979 = vadd.f32 0.0, %v978
  %v980 = vpop.f32.mrb[0].mxu0
  %v981 = vpop.f32.mrb[0].mxu0
  %v982 = vpop.f32.mrb[0].mxu0
  %983 = vdwg.mxu0
  %v985 = vrot.slane %v979, 6
  %v987 = vadd.f32 %v853, %v985
  %v988 = vtanh.pop %v987
  %v989 = vxor.u32 %v987, 2147483648
  %v990 = vmul.f32 %v989, 1.442695
  %v991 = vpow.pop %v990
  %v992 = vadd.f32 %v991, 1.0
  %v993 = vrcp.pop %v992
  %v994 = vmul.f32 1.0, %v993
  %v995 = vsel %vm39, %v988, %v994
  %v997 = vrot.slane %v930, 6
  %v999 = vmul.f32 %v995, %v997
  %1001 = vrot.lane.b32.xlu0 %v995, 64
  %v1002 = vpop.permute.xlu0 %1001
  %v1004 = vmul.f32 %v995, %v1002
  %1006 = vrot.lane.b32.xlu0 %v1004, 32
  %v1007 = vpop.permute.xlu0 %1006
  %v1009 = vadd.f32 %v999, %v1007
  %v1010 = vtanh.pop %v1009
  %1012 = vrot.lane.b32.xlu0 %v1010, 64
  %v1013 = vpop.permute.xlu0 %1012
  %v1015 = vmul.f32 %v995, %v1013
  %v1016 = vpack.c.bf16 %v1015, %v1015
  %v1018 = vrot.slane %v1016, 1
  %1019 = vrot.lane.b32.xlu0 %v1018, 32
  %v1020 = vpop.permute.xlu0 %1019
  %v1022 = vsel %vm116, %v1020, 0
  %1024 = vmatprep.subr.bf16.mxu0 0
  %1025 = vmatpush1.bf16.msra.mxu0 %v867
  %1026 = vmatprep.subr.bf16.mxu0 0
  %1027 = vmatpush1.bf16.msra.mxu0 %v868
  %1028 = vmatprep.subr.bf16.mxu0 0
  %1029 = vmatpush1.bf16.msra.mxu0 0
  %1030 = vmatprep.subr.bf16.mxu0 0
  %1031 = vmatpush1.bf16.msra.mxu0 0
  %1032 = vmatprep.subr.bf16.mxu0 0
  %1033 = vmatpush1.bf16.msra.mxu0 0
  %1034 = vmatprep.subr.bf16.mxu0 0
  %1035 = vmatpush1.bf16.msra.mxu0 0
  %1036 = vmatprep.subr.bf16.mxu0 0
  %1037 = vmatpush1.bf16.msra.mxu0 0
  %1038 = vmatprep.subr.bf16.mxu0 0
  %1039 = vmatpush1.bf16.msra.mxu0 0
  %1040 = vmatprep.subr.bf16.mxu0 0
  %1041 = vmatpush1.bf16.msra.mxu0 0
  %1042 = vmatprep.subr.bf16.mxu0 0
  %1043 = vmatpush1.bf16.msra.mxu0 0
  %1044 = vmatprep.subr.bf16.mxu0 0
  %1045 = vmatpush1.bf16.msra.mxu0 0
  %1046 = vmatprep.subr.bf16.mxu0 0
  %1047 = vmatpush1.bf16.msra.mxu0 0
  %1048 = vmatprep.subr.bf16.mxu0 0
  %1049 = vmatpush1.bf16.msra.mxu0 0
  %1050 = vmatprep.subr.bf16.mxu0 0
  %1051 = vmatpush1.bf16.msra.mxu0 0
  %1052 = vmatprep.subr.bf16.mxu0 0
  %1053 = vmatpush1.bf16.msra.mxu0 0
  %1054 = vmatprep.subr.bf16.mxu0 0
  %1055 = vmatpush1.bf16.msra.mxu0 0
  %1056 = vmatprep.mubr.bf16.mxu0 0
  %1057 = vmatmul.mubr.bf16.gmra.mrb[0].mxu0 %v1022
  %v1058 = vpop.f32.mrb[0].mxu0
  %v1059 = vadd.f32 0.0, %v1058
  %v1060 = vpop.f32.mrb[0].mxu0
  %v1061 = vpop.f32.mrb[0].mxu0
  %v1062 = vpop.f32.mrb[0].mxu0
  %1063 = vdwg.mxu0
  %v1065 = vrot.slane %v1059, 4
  %v1067 = vadd.f32 %v853, %v1065
  %v1068 = vtanh.pop %v1067
  %v1069 = vxor.u32 %v1067, 2147483648
  %v1070 = vmul.f32 %v1069, 1.442695
  %v1071 = vpow.pop %v1070
  %v1072 = vadd.f32 %v1071, 1.0
  %v1073 = vrcp.pop %v1072
  %v1074 = vmul.f32 1.0, %v1073
  %v1075 = vsel %vm39, %v1068, %v1074
  %v1077 = vrot.slane %v1009, 6
  %v1079 = vmul.f32 %v1075, %v1077
  %1081 = vrot.lane.b32.xlu0 %v1075, 64
  %v1082 = vpop.permute.xlu0 %1081
  %v1084 = vmul.f32 %v1075, %v1082
  %1086 = vrot.lane.b32.xlu0 %v1084, 32
  %v1087 = vpop.permute.xlu0 %1086
  %v1089 = vadd.f32 %v1079, %v1087
  %v1090 = vtanh.pop %v1089
  %1092 = vrot.lane.b32.xlu0 %v1090, 64
  %v1093 = vpop.permute.xlu0 %1092
  %v1095 = vmul.f32 %v1075, %v1093
  %v1096 = vpack.c.bf16 %v1095, %v1095
  %v1098 = vrot.slane %v1096, 2
  %1099 = vrot.lane.b32.xlu0 %v1098, 32
  %v1100 = vpop.permute.xlu0 %1099
  %v1102 = vsel %vm116, %v1100, 0
  %1104 = vmatprep.subr.bf16.mxu0 0
  %1105 = vmatpush1.bf16.msra.mxu0 %v867
  %1106 = vmatprep.subr.bf16.mxu0 0
  %1107 = vmatpush1.bf16.msra.mxu0 %v868
  %1108 = vmatprep.subr.bf16.mxu0 0
  %1109 = vmatpush1.bf16.msra.mxu0 0
  %1110 = vmatprep.subr.bf16.mxu0 0
  %1111 = vmatpush1.bf16.msra.mxu0 0
  %1112 = vmatprep.subr.bf16.mxu0 0
  %1113 = vmatpush1.bf16.msra.mxu0 0
  %1114 = vmatprep.subr.bf16.mxu0 0
  %1115 = vmatpush1.bf16.msra.mxu0 0
  %1116 = vmatprep.subr.bf16.mxu0 0
  %1117 = vmatpush1.bf16.msra.mxu0 0
  %1118 = vmatprep.subr.bf16.mxu0 0
  %1119 = vmatpush1.bf16.msra.mxu0 0
  %1120 = vmatprep.subr.bf16.mxu0 0
  %1121 = vmatpush1.bf16.msra.mxu0 0
  %1122 = vmatprep.subr.bf16.mxu0 0
  %1123 = vmatpush1.bf16.msra.mxu0 0
  %1124 = vmatprep.subr.bf16.mxu0 0
  %1125 = vmatpush1.bf16.msra.mxu0 0
  %1126 = vmatprep.subr.bf16.mxu0 0
  %1127 = vmatpush1.bf16.msra.mxu0 0
  %1128 = vmatprep.subr.bf16.mxu0 0
  %1129 = vmatpush1.bf16.msra.mxu0 0
  %1130 = vmatprep.subr.bf16.mxu0 0
  %1131 = vmatpush1.bf16.msra.mxu0 0
  %1132 = vmatprep.subr.bf16.mxu0 0
  %1133 = vmatpush1.bf16.msra.mxu0 0
  %1134 = vmatprep.subr.bf16.mxu0 0
  %1135 = vmatpush1.bf16.msra.mxu0 0
  %1136 = vmatprep.mubr.bf16.mxu0 0
  %1137 = vmatmul.mubr.bf16.gmra.mrb[0].mxu0 %v1102
  %v1138 = vpop.f32.mrb[0].mxu0
  %v1139 = vadd.f32 0.0, %v1138
  %v1140 = vpop.f32.mrb[0].mxu0
  %v1141 = vpop.f32.mrb[0].mxu0
  %v1142 = vpop.f32.mrb[0].mxu0
  %1143 = vdwg.mxu0
  %v1145 = vrot.slane %v1139, 2
  %v1147 = vadd.f32 %v853, %v1145
  %v1148 = vtanh.pop %v1147
  %v1149 = vxor.u32 %v1147, 2147483648
  %v1150 = vmul.f32 %v1149, 1.442695
  %v1151 = vpow.pop %v1150
  %v1152 = vadd.f32 %v1151, 1.0
  %v1153 = vrcp.pop %v1152
  %v1154 = vmul.f32 1.0, %v1153
  %v1155 = vsel %vm39, %v1148, %v1154
  %v1157 = vrot.slane %v1089, 6
  %v1159 = vmul.f32 %v1155, %v1157
  %1161 = vrot.lane.b32.xlu0 %v1155, 64
  %v1162 = vpop.permute.xlu0 %1161
  %v1164 = vmul.f32 %v1155, %v1162
  %1166 = vrot.lane.b32.xlu0 %v1164, 32
  %v1167 = vpop.permute.xlu0 %1166
  %v1169 = vadd.f32 %v1159, %v1167
  %v1170 = vtanh.pop %v1169
  %1172 = vrot.lane.b32.xlu0 %v1170, 64
  %v1173 = vpop.permute.xlu0 %1172
  %v1175 = vmul.f32 %v1155, %v1173
  %v1176 = vpack.c.bf16 %v1175, %v1175
  %v1178 = vrot.slane %v1176, 3
  %1179 = vrot.lane.b32.xlu0 %v1178, 32
  %v1180 = vpop.permute.xlu0 %1179
  %v1182 = vsel %vm116, %v1180, 0
  %1184 = vmatprep.subr.bf16.mxu0 0
  %1185 = vmatpush1.bf16.msra.mxu0 %v867
  %1186 = vmatprep.subr.bf16.mxu0 0
  %1187 = vmatpush1.bf16.msra.mxu0 %v868
  %1188 = vmatprep.subr.bf16.mxu0 0
  %1189 = vmatpush1.bf16.msra.mxu0 0
  %1190 = vmatprep.subr.bf16.mxu0 0
  %1191 = vmatpush1.bf16.msra.mxu0 0
  %1192 = vmatprep.subr.bf16.mxu0 0
  %1193 = vmatpush1.bf16.msra.mxu0 0
  %1194 = vmatprep.subr.bf16.mxu0 0
  %1195 = vmatpush1.bf16.msra.mxu0 0
  %1196 = vmatprep.subr.bf16.mxu0 0
  %1197 = vmatpush1.bf16.msra.mxu0 0
  %1198 = vmatprep.subr.bf16.mxu0 0
  %1199 = vmatpush1.bf16.msra.mxu0 0
  %1200 = vmatprep.subr.bf16.mxu0 0
  %1201 = vmatpush1.bf16.msra.mxu0 0
  %1202 = vmatprep.subr.bf16.mxu0 0
  %1203 = vmatpush1.bf16.msra.mxu0 0
  %1204 = vmatprep.subr.bf16.mxu0 0
  %1205 = vmatpush1.bf16.msra.mxu0 0
  %1206 = vmatprep.subr.bf16.mxu0 0
  %1207 = vmatpush1.bf16.msra.mxu0 0
  %1208 = vmatprep.subr.bf16.mxu0 0
  %1209 = vmatpush1.bf16.msra.mxu0 0
  %1210 = vmatprep.subr.bf16.mxu0 0
  %1211 = vmatpush1.bf16.msra.mxu0 0
  %1212 = vmatprep.subr.bf16.mxu0 0
  %1213 = vmatpush1.bf16.msra.mxu0 0
  %1214 = vmatprep.subr.bf16.mxu0 0
  %1215 = vmatpush1.bf16.msra.mxu0 0
  %1216 = vmatprep.mubr.bf16.mxu0 0
  %1217 = vmatmul.mubr.bf16.gmra.mrb[0].mxu0 %v1182
  %v1218 = vpop.f32.mrb[0].mxu0
  %v1219 = vadd.f32 0.0, %v1218
  %v1220 = vpop.f32.mrb[0].mxu0
  %v1221 = vpop.f32.mrb[0].mxu0
  %v1222 = vpop.f32.mrb[0].mxu0
  %1223 = vdwg.mxu0
  %v1224 = vadd.f32 %v856, %v1219
  %v1225 = vtanh.pop %v1224
  %v1226 = vxor.u32 %v1224, 2147483648
  %v1227 = vmul.f32 %v1226, 1.442695
  %v1228 = vpow.pop %v1227
  %v1229 = vadd.f32 %v1228, 1.0
  %v1230 = vrcp.pop %v1229
  %v1231 = vmul.f32 1.0, %v1230
  %v1232 = vsel %vm39, %v1225, %v1231
  %v1234 = vrot.slane %v1169, 6
  %v1236 = vmul.f32 %v1232, %v1234
  %1238 = vrot.lane.b32.xlu0 %v1232, 64
  %v1239 = vpop.permute.xlu0 %1238
  %v1241 = vmul.f32 %v1232, %v1239
  %1243 = vrot.lane.b32.xlu0 %v1241, 32
  %v1244 = vpop.permute.xlu0 %1243
  %v1246 = vadd.f32 %v1236, %v1244
  %v1247 = vtanh.pop %v1246
  %1249 = vrot.lane.b32.xlu0 %v1247, 64
  %v1250 = vpop.permute.xlu0 %1249
  %v1252 = vmul.f32 %v1232, %v1250
  %v1253 = vpack.c.bf16 %v1252, %v1252
  %1255 = vrot.lane.b32.xlu0 %v1253, 32
  %v1256 = vpop.permute.xlu0 %1255
  %v1258 = vsel %vm116, %v1256, 0
  %1260 = vmatprep.subr.bf16.mxu0 0
  %1261 = vmatpush1.bf16.msra.mxu0 %v867
  %1262 = vmatprep.subr.bf16.mxu0 0
  %1263 = vmatpush1.bf16.msra.mxu0 %v868
  %1264 = vmatprep.subr.bf16.mxu0 0
  %1265 = vmatpush1.bf16.msra.mxu0 0
  %1266 = vmatprep.subr.bf16.mxu0 0
  %1267 = vmatpush1.bf16.msra.mxu0 0
  %1268 = vmatprep.subr.bf16.mxu0 0
  %1269 = vmatpush1.bf16.msra.mxu0 0
  %1270 = vmatprep.subr.bf16.mxu0 0
  %1271 = vmatpush1.bf16.msra.mxu0 0
  %1272 = vmatprep.subr.bf16.mxu0 0
  %1273 = vmatpush1.bf16.msra.mxu0 0
  %1274 = vmatprep.subr.bf16.mxu0 0
  %1275 = vmatpush1.bf16.msra.mxu0 0
  %1276 = vmatprep.subr.bf16.mxu0 0
  %1277 = vmatpush1.bf16.msra.mxu0 0
  %1278 = vmatprep.subr.bf16.mxu0 0
  %1279 = vmatpush1.bf16.msra.mxu0 0
  %1280 = vmatprep.subr.bf16.mxu0 0
  %1281 = vmatpush1.bf16.msra.mxu0 0
  %1282 = vmatprep.subr.bf16.mxu0 0
  %1283 = vmatpush1.bf16.msra.mxu0 0
  %1284 = vmatprep.subr.bf16.mxu0 0
  %1285 = vmatpush1.bf16.msra.mxu0 0
  %1286 = vmatprep.subr.bf16.mxu0 0
  %1287 = vmatpush1.bf16.msra.mxu0 0
  %1288 = vmatprep.subr.bf16.mxu0 0
  %1289 = vmatpush1.bf16.msra.mxu0 0
  %1290 = vmatprep.subr.bf16.mxu0 0
  %1291 = vmatpush1.bf16.msra.mxu0 0
  %1292 = vmatprep.mubr.bf16.mxu0 0
  %1293 = vmatmul.mubr.bf16.gmra.mrb[0].mxu0 %v1258
  %v1294 = vpop.f32.mrb[0].mxu0
  %v1295 = vadd.f32 0.0, %v1294
  %v1296 = vpop.f32.mrb[0].mxu0
  %v1297 = vpop.f32.mrb[0].mxu0
  %v1298 = vpop.f32.mrb[0].mxu0
  %1299 = vdwg.mxu0
  %v1301 = vrot.slane %v1295, 6
  %v1303 = vadd.f32 %v856, %v1301
  %v1304 = vtanh.pop %v1303
  %v1305 = vxor.u32 %v1303, 2147483648
  %v1306 = vmul.f32 %v1305, 1.442695
  %v1307 = vpow.pop %v1306
  %v1308 = vadd.f32 %v1307, 1.0
  %v1309 = vrcp.pop %v1308
  %v1310 = vmul.f32 1.0, %v1309
  %v1311 = vsel %vm39, %v1304, %v1310
  %v1313 = vrot.slane %v1246, 6
  %v1315 = vmul.f32 %v1311, %v1313
  %1317 = vrot.lane.b32.xlu0 %v1311, 64
  %v1318 = vpop.permute.xlu0 %1317
  %v1320 = vmul.f32 %v1311, %v1318
  %1322 = vrot.lane.b32.xlu0 %v1320, 32
  %v1323 = vpop.permute.xlu0 %1322
  %v1325 = vadd.f32 %v1315, %v1323
  %v1326 = vtanh.pop %v1325
  %1328 = vrot.lane.b32.xlu0 %v1326, 64
  %v1329 = vpop.permute.xlu0 %1328
  %v1331 = vmul.f32 %v1311, %v1329
  %v1332 = vpack.c.bf16 %v1331, %v1331
  %v1334 = vrot.slane %v1332, 1
  %1335 = vrot.lane.b32.xlu0 %v1334, 32
  %v1336 = vpop.permute.xlu0 %1335
  %v1338 = vsel %vm116, %v1336, 0
  %1340 = vmatprep.subr.bf16.mxu0 0
  %1341 = vmatpush1.bf16.msra.mxu0 %v867
  %1342 = vmatprep.subr.bf16.mxu0 0
  %1343 = vmatpush1.bf16.msra.mxu0 %v868
  %1344 = vmatprep.subr.bf16.mxu0 0
  %1345 = vmatpush1.bf16.msra.mxu0 0
  %1346 = vmatprep.subr.bf16.mxu0 0
  %1347 = vmatpush1.bf16.msra.mxu0 0
  %1348 = vmatprep.subr.bf16.mxu0 0
  %1349 = vmatpush1.bf16.msra.mxu0 0
  %1350 = vmatprep.subr.bf16.mxu0 0
  %1351 = vmatpush1.bf16.msra.mxu0 0
  %1352 = vmatprep.subr.bf16.mxu0 0
  %1353 = vmatpush1.bf16.msra.mxu0 0
  %1354 = vmatprep.subr.bf16.mxu0 0
  %1355 = vmatpush1.bf16.msra.mxu0 0
  %1356 = vmatprep.subr.bf16.mxu0 0
  %1357 = vmatpush1.bf16.msra.mxu0 0
  %1358 = vmatprep.subr.bf16.mxu0 0
  %1359 = vmatpush1.bf16.msra.mxu0 0
  %1360 = vmatprep.subr.bf16.mxu0 0
  %1361 = vmatpush1.bf16.msra.mxu0 0
  %1362 = vmatprep.subr.bf16.mxu0 0
  %1363 = vmatpush1.bf16.msra.mxu0 0
  %1364 = vmatprep.subr.bf16.mxu0 0
  %1365 = vmatpush1.bf16.msra.mxu0 0
  %1366 = vmatprep.subr.bf16.mxu0 0
  %1367 = vmatpush1.bf16.msra.mxu0 0
  %1368 = vmatprep.subr.bf16.mxu0 0
  %1369 = vmatpush1.bf16.msra.mxu0 0
  %1370 = vmatprep.subr.bf16.mxu0 0
  %1371 = vmatpush1.bf16.msra.mxu0 0
  %1372 = vmatprep.mubr.bf16.mxu0 0
  %1373 = vmatmul.mubr.bf16.gmra.mrb[0].mxu0 %v1338
  %v1374 = vpop.f32.mrb[0].mxu0
  %v1375 = vadd.f32 0.0, %v1374
  %v1376 = vpop.f32.mrb[0].mxu0
  %v1377 = vpop.f32.mrb[0].mxu0
  %v1378 = vpop.f32.mrb[0].mxu0
  %1379 = vdwg.mxu0
  %v1381 = vrot.slane %v1375, 4
  %v1383 = vadd.f32 %v856, %v1381
  %v1384 = vtanh.pop %v1383
  %v1385 = vxor.u32 %v1383, 2147483648
  %v1386 = vmul.f32 %v1385, 1.442695
  %v1387 = vpow.pop %v1386
  %v1388 = vadd.f32 %v1387, 1.0
  %v1389 = vrcp.pop %v1388
  %v1390 = vmul.f32 1.0, %v1389
  %v1391 = vsel %vm39, %v1384, %v1390
  %v1393 = vrot.slane %v1325, 6
  %v1395 = vmul.f32 %v1391, %v1393
  %1397 = vrot.lane.b32.xlu0 %v1391, 64
  %v1398 = vpop.permute.xlu0 %1397
  %v1400 = vmul.f32 %v1391, %v1398
  %1402 = vrot.lane.b32.xlu0 %v1400, 32
  %v1403 = vpop.permute.xlu0 %1402
  %v1405 = vadd.f32 %v1395, %v1403
  %v1406 = vtanh.pop %v1405
  %1408 = vrot.lane.b32.xlu0 %v1406, 64
  %v1409 = vpop.permute.xlu0 %1408
  %v1411 = vmul.f32 %v1391, %v1409
  %v1412 = vpack.c.bf16 %v1411, %v1411
  %v1414 = vrot.slane %v1412, 2
  %1415 = vrot.lane.b32.xlu0 %v1414, 32
  %v1416 = vpop.permute.xlu0 %1415
  %v1418 = vsel %vm116, %v1416, 0
  %1420 = vmatprep.subr.bf16.mxu0 0
  %1421 = vmatpush1.bf16.msra.mxu0 %v867
  %1422 = vmatprep.subr.bf16.mxu0 0
  %1423 = vmatpush1.bf16.msra.mxu0 %v868
  %1424 = vmatprep.subr.bf16.mxu0 0
  %1425 = vmatpush1.bf16.msra.mxu0 0
  %1426 = vmatprep.subr.bf16.mxu0 0
  %1427 = vmatpush1.bf16.msra.mxu0 0
  %1428 = vmatprep.subr.bf16.mxu0 0
  %1429 = vmatpush1.bf16.msra.mxu0 0
  %1430 = vmatprep.subr.bf16.mxu0 0
  %1431 = vmatpush1.bf16.msra.mxu0 0
  %1432 = vmatprep.subr.bf16.mxu0 0
  %1433 = vmatpush1.bf16.msra.mxu0 0
  %1434 = vmatprep.subr.bf16.mxu0 0
  %1435 = vmatpush1.bf16.msra.mxu0 0
  %1436 = vmatprep.subr.bf16.mxu0 0
  %1437 = vmatpush1.bf16.msra.mxu0 0
  %1438 = vmatprep.subr.bf16.mxu0 0
  %1439 = vmatpush1.bf16.msra.mxu0 0
  %1440 = vmatprep.subr.bf16.mxu0 0
  %1441 = vmatpush1.bf16.msra.mxu0 0
  %1442 = vmatprep.subr.bf16.mxu0 0
  %1443 = vmatpush1.bf16.msra.mxu0 0
  %1444 = vmatprep.subr.bf16.mxu0 0
  %1445 = vmatpush1.bf16.msra.mxu0 0
  %1446 = vmatprep.subr.bf16.mxu0 0
  %1447 = vmatpush1.bf16.msra.mxu0 0
  %1448 = vmatprep.subr.bf16.mxu0 0
  %1449 = vmatpush1.bf16.msra.mxu0 0
  %1450 = vmatprep.subr.bf16.mxu0 0
  %1451 = vmatpush1.bf16.msra.mxu0 0
  %1452 = vmatprep.mubr.bf16.mxu0 0
  %1453 = vmatmul.mubr.bf16.gmra.mrb[0].mxu0 %v1418
  %v1454 = vpop.f32.mrb[0].mxu0
  %v1455 = vadd.f32 0.0, %v1454
  %v1456 = vpop.f32.mrb[0].mxu0
  %v1457 = vpop.f32.mrb[0].mxu0
  %v1458 = vpop.f32.mrb[0].mxu0
  %1459 = vdwg.mxu0
  %v1461 = vrot.slane %v1455, 2
  %v1463 = vadd.f32 %v856, %v1461
  %v1464 = vtanh.pop %v1463
  %v1465 = vxor.u32 %v1463, 2147483648
  %v1466 = vmul.f32 %v1465, 1.442695
  %v1467 = vpow.pop %v1466
  %v1468 = vadd.f32 %v1467, 1.0
  %v1469 = vrcp.pop %v1468
  %v1470 = vmul.f32 1.0, %v1469
  %v1471 = vsel %vm39, %v1464, %v1470
  %v1473 = vrot.slane %v1405, 6
  %v1475 = vmul.f32 %v1471, %v1473
  %1477 = vrot.lane.b32.xlu0 %v1471, 64
  %v1478 = vpop.permute.xlu0 %1477
  %v1480 = vmul.f32 %v1471, %v1478
  %1482 = vrot.lane.b32.xlu0 %v1480, 32
  %v1483 = vpop.permute.xlu0 %1482
  %v1485 = vadd.f32 %v1475, %v1483
  %v1486 = vtanh.pop %v1485
  %1488 = vrot.lane.b32.xlu0 %v1486, 64
  %v1489 = vpop.permute.xlu0 %1488
  %v1491 = vmul.f32 %v1471, %v1489
  %v1492 = vld [vmem:[%s7] sm:$0x1]
  %v1494 = vlaneseq
  %v1495 = vshrl.u32 %v1494, 7
  %v1496 = vsub.s32 0, %v1495
  %v1497 = vrot.slane %v1492, %v1496
  %1498 = vrot.lane.b32.xlu0 %v1497, 96
  %v1499 = vpop.permute.xlu0 %1498
  %v1501 = vmul.f32 %v1491, %v1499
  %1503 = vrot.lane.b32.xlu0 %v1501, 32
  %v1504 = vpop.permute.xlu0 %1503
  %v1506 = vsel %vm447, %v1504, 0.0
  %1507 = vadd.xlane.f32.xlu0 %v1506
  %v1508 = vpop.xlane.xlu0 %1507
  %v1509 = vld [vmem:[#allocation3] sm:$0x1]
  %v1511 = vlaneseq
  %v1512 = vshrl.u32 %v1511, 7
  %v1513 = vsub.s32 0, %v1512
  %v1514 = vrot.slane %v1509, %v1513
  %v1516 = vadd.f32 %v1508, %v1514
  %vm1517 = vcmask 7174
  %1518 = vst.msk [vmem:[%s9 - $0x6] sm:$0xc0] %vm1517, %v1516
  // Predicated region
  $region38: #{bitcoin_lstm_forward.1} parent=0 // pred_check
    _
  $region39: #{bitcoin_lstm_forward.1} parent=0 // pred_check_branch
    %1520 = sbr.rel (0) target = $region41
  $region40: #{bitcoin_lstm_forward.1} parent=0 // pred_region
    _
  $region41: #{bitcoin_lstm_forward.1} parent=0 // pred_fallthru
    _
  // Predicated region
  $region42: #{bitcoin_lstm_forward.1} parent=0 // pred_check
    _
  $region43: #{bitcoin_lstm_forward.1} parent=0 // pred_check_branch
    %1522 = sbr.rel (0) target = $region45
  $region44: #{bitcoin_lstm_forward.1} parent=0 // pred_region
    _
  $region45: #{bitcoin_lstm_forward.1} parent=0 // pred_fallthru
    _

</llo_original>
